<compile_context>
chip_gen: v6e
topology: v6e:2x2x1
jax: 0.10.0
libtpu: 0.0.40
codegen_flags: <defaults>
</compile_context>

<pallas_src>
import math

import jax
import jax.numpy as jnp
from jax.experimental import pallas as pl
from jax.experimental.pallas import tpu as pltpu


def _make_kernel(C: int, F: int, start: int):
    """Kernel closed over static channel count / octave count / start exponent.

    Frequencies enter as Python float scalars (exact powers of two), so nothing
    is captured as an array constant.
    """

    def kernel(x_ref, o_ref):
        # x_ref : (C,      TR, 128) in VMEM
        # o_ref : (C*(1+2F), TR, 128) in VMEM
        x = x_ref[...]
        xf = x.astype(jnp.float32)  # f32 compute (accuracy + v5e EUP/VPU path)

        # Passthrough channels 0..C-1 : dense leading-dim slab store.
        o_ref[pl.ds(0, C)] = x.astype(o_ref.dtype)

        # One dense (C, TR, 128) sin/cos slab per octave; stores are per-channel
        # (TR, 128) slabs at leading-dim offsets -> always unmasked vst.
        for k in range(F):
            fk = float((2.0 ** (start + k)) * 2.0 * math.pi)  # exact scalar literal
            arg = xf * fk
            s = jnp.sin(arg)
            co = jnp.cos(arg)
            for c in range(C):
                # torch ordering: output channel C + c*F + k  <- sin(f_k * x_c)
                o_ref[C + c * F + k] = s[c].astype(o_ref.dtype)
                o_ref[C + C * F + c * F + k] = co[c].astype(o_ref.dtype)

    return kernel


def _plan_rows(HW: int, C: int, C_out: int, itemsize: int):
    """Return (R_padded, TR): number of 128-lane rows (after padding) and the
    row-tile size.  TR is VMEM-budgeted (~6 MiB per in+out block copy, so the
    double-buffered footprint stays ~12 MiB -> safe on every TPU generation)."""
    R = -(-HW // 128)  # rows after padding spatial dim to a multiple of 128 lanes

    budget = 6 * 1024 * 1024  # bytes for one (input block + output block) copy
    cap = budget // ((C + C_out) * 128 * itemsize)
    cap = max(8, (cap // 8) * 8)  # multiple of 8 sublanes

    if R <= cap:
        return R, R  # full-extent row block (legal even if R % 8 != 0)

    # Need to tile rows: pad rows to a multiple of 8, pick the largest
    # multiple-of-8 divisor <= cap (8 always divides, so this always succeeds).
    R8 = -(-R // 8) * 8
    tr = 8
    for cand in range(cap, 7, -8):
        if R8 % cand == 0:
            tr = cand
            break
    return R8, tr


def image_fourier_features(x, start: int = 6, end: int = 8):
    """Pallas implementation of ImageFourierFeatures.forward.

    x: (B, C, H, W) NCHW, any float dtype.
    returns: (B, C * (1 + 2*(end-start)), H, W), same dtype as x.
    """
    B, C, H, W = x.shape
    F = end - start
    if F <= 0:
        return x
    C_out = C * (1 + 2 * F)
    HW = H * W
    itemsize = jnp.dtype(x.dtype).itemsize

    R, TR = _plan_rows(HW, C, C_out, itemsize)
    HW_pad = R * 128
    n_row_tiles = R // TR

    # (B, C, H, W) -> (B, C, R, 128): spatial dim on (sublane, lane) axes.
    x_flat = x.reshape(B, C, HW)
    if HW_pad != HW:
        x_flat = jnp.pad(x_flat, ((0, 0), (0, 0), (0, HW_pad - HW)))
    x_rows = x_flat.reshape(B, C, R, 128)

    kernel = _make_kernel(C, F, start)

    # Memory-bound kernel: output traffic is (1 + 2F) x input traffic.
    cost = pl.CostEstimate(
        flops=B * C * F * HW_pad,                 # one multiply per sin/cos pair
        transcendentals=2 * B * C * F * HW_pad,   # sin + cos
        bytes_accessed=itemsize * B * HW_pad * (C + C_out),
    )

    out_rows = pl.pallas_call(
        kernel,
        out_shape=jax.ShapeDtypeStruct((B, C_out, R, 128), x.dtype),
        grid_spec=pltpu.PrefetchScalarGridSpec(
            num_scalar_prefetch=0,
            grid=(B, n_row_tiles),
            in_specs=[
                # batch dim squeezed; one (row-tile) per grid step
                pl.BlockSpec((None, C, TR, 128), lambda b, j: (b, 0, j, 0)),
            ],
            out_specs=pl.BlockSpec((None, C_out, TR, 128), lambda b, j: (b, 0, j, 0)),
        ),
        compiler_params=pltpu.CompilerParams(
            dimension_semantics=("parallel", "parallel"),
            vmem_limit_bytes=32 * 1024 * 1024,
        ),
        cost_estimate=cost,
    )(x_rows)

    out_flat = out_rows.reshape(B, C_out, HW_pad)
    if HW_pad != HW:
        out_flat = out_flat[:, :, :HW]
    return out_flat.reshape(B, C_out, H, W)


def _reference(x, start=6, end=8):
    """Pure-JAX reference mirroring the PyTorch forward."""
    B, C, H, W = x.shape
    freqs = 2.0 ** jnp.arange(start, end, dtype=jnp.float32)
    F = freqs.shape[0]
    freqs_rep = jnp.tile(freqs * 2.0 * math.pi, C)          # freqs.repeat(C)
    x_rep = jnp.repeat(x, F, axis=1)                        # repeat_interleave(dim=1)
    scaled = freqs_rep[None, :, None, None] * x_rep
    return jnp.concatenate([x, jnp.sin(scaled), jnp.cos(scaled)], axis=1)


if __name__ == "__main__":
    key = jax.random.PRNGKey(0)
    B, C, H, W = 2, 4, 16, 16
    x = jax.random.normal(key, (B, C, H, W), dtype=jnp.float32)

    out = image_fourier_features(x, start=6, end=8)
    out = jax.block_until_ready(out)

    ref = _reference(x, start=6, end=8)

    assert out.shape == (B, C * (1 + 2 * 2), H, W), out.shape
    assert out.dtype == x.dtype
    # sin/cos of large arguments -> allow modest tolerance for range-reduction diffs
    max_err = float(jnp.max(jnp.abs(out - ref)))
    assert max_err < 2e-2, f"max abs error {max_err}"

    print("KERNEL_OK")
</pallas_src>

<mosaic_0001>
module attributes {stable_mosaic.version = 11 : i64} {
  func.func @kernel(%arg0: i32, %arg1: i32, %arg2: memref<1x4x2x128xf32, #tpu.memory_space<vmem>>, %arg3: memref<1x20x2x128xf32, #tpu.memory_space<vmem>>) attributes {dimension_semantics = [#tpu.dimension_semantics<parallel>, #tpu.dimension_semantics<parallel>], iteration_bounds = array<i64: 2, 1>, scalar_prefetch = 0 : i64, scratch_operands = 0 : i64, tpu.core_type = #tpu.core_type<tc>, window_params = [{transform_indices = @transform_0, window_bounds = array<i64: 1, 4, 2, 128>}, {transform_indices = @transform_1, window_bounds = array<i64: 1, 20, 2, 128>}]} {
    %c0 = arith.constant 0 : index
    %c0_0 = arith.constant 0 : index
    %c0_1 = arith.constant 0 : index
    %c0_2 = arith.constant 0 : index
    %0 = vector.load %arg2[%c0, %c0_0, %c0_1, %c0_2] : memref<1x4x2x128xf32, #tpu.memory_space<vmem>>, vector<1x4x2x128xf32>
    %1 = vector.shape_cast %0 : vector<1x4x2x128xf32> to vector<4x2x128xf32>
    %c0_3 = arith.constant 0 : index
    %c0_4 = arith.constant 0 : index
    %c0_5 = arith.constant 0 : index
    %c0_6 = arith.constant 0 : index
    %2 = vector.load %arg3[%c0_3, %c0_4, %c0_5, %c0_6] : memref<1x20x2x128xf32, #tpu.memory_space<vmem>>, vector<1x4x2x128xf32>
    %3 = vector.shape_cast %2 : vector<1x4x2x128xf32> to vector<4x2x128xf32>
    %4 = vector.shape_cast %1 : vector<4x2x128xf32> to vector<1x4x2x128xf32>
    tpu.vector_store %arg3[%c0_3, %c0_4, %c0_5, %c0_6], %4 {strides = array<i32>} : memref<1x20x2x128xf32, #tpu.memory_space<vmem>>, vector<1x4x2x128xf32>,
    %cst = arith.constant 402.123871 : f32
    %5 = vector.broadcast %cst : f32 to vector<4x2x128xf32>
    %6 = arith.mulf %1, %5 : vector<4x2x128xf32>
    %7 = math.sin %6 : vector<4x2x128xf32>
    %8 = math.cos %6 : vector<4x2x128xf32>
    %9 = vector.extract_strided_slice %7 {offsets = [0, 0, 0], sizes = [1, 2, 128], strides = [1, 1, 1]} : vector<4x2x128xf32> to vector<1x2x128xf32>
    %10 = vector.shape_cast %9 : vector<1x2x128xf32> to vector<2x128xf32>
    %c0_7 = arith.constant 0 : index
    %c4 = arith.constant 4 : index
    %c0_8 = arith.constant 0 : index
    %c0_9 = arith.constant 0 : index
    %11 = vector.load %arg3[%c0_7, %c4, %c0_8, %c0_9] : memref<1x20x2x128xf32, #tpu.memory_space<vmem>>, vector<1x1x2x128xf32>
    %12 = vector.shape_cast %11 : vector<1x1x2x128xf32> to vector<2x128xf32>
    %13 = vector.shape_cast %10 : vector<2x128xf32> to vector<1x1x2x128xf32>
    tpu.vector_store %arg3[%c0_7, %c4, %c0_8, %c0_9], %13 {strides = array<i32>} : memref<1x20x2x128xf32, #tpu.memory_space<vmem>>, vector<1x1x2x128xf32>,
    %14 = vector.extract_strided_slice %8 {offsets = [0, 0, 0], sizes = [1, 2, 128], strides = [1, 1, 1]} : vector<4x2x128xf32> to vector<1x2x128xf32>
    %15 = vector.shape_cast %14 : vector<1x2x128xf32> to vector<2x128xf32>
    %c0_10 = arith.constant 0 : index
    %c12 = arith.constant 12 : index
    %c0_11 = arith.constant 0 : index
    %c0_12 = arith.constant 0 : index
    %16 = vector.load %arg3[%c0_10, %c12, %c0_11, %c0_12] : memref<1x20x2x128xf32, #tpu.memory_space<vmem>>, vector<1x1x2x128xf32>
    %17 = vector.shape_cast %16 : vector<1x1x2x128xf32> to vector<2x128xf32>
    %18 = vector.shape_cast %15 : vector<2x128xf32> to vector<1x1x2x128xf32>
    tpu.vector_store %arg3[%c0_10, %c12, %c0_11, %c0_12], %18 {strides = array<i32>} : memref<1x20x2x128xf32, #tpu.memory_space<vmem>>, vector<1x1x2x128xf32>,
    %19 = vector.extract_strided_slice %7 {offsets = [1, 0, 0], sizes = [1, 2, 128], strides = [1, 1, 1]} : vector<4x2x128xf32> to vector<1x2x128xf32>
    %20 = vector.shape_cast %19 : vector<1x2x128xf32> to vector<2x128xf32>
    %c0_13 = arith.constant 0 : index
    %c6 = arith.constant 6 : index
    %c0_14 = arith.constant 0 : index
    %c0_15 = arith.constant 0 : index
    %21 = vector.load %arg3[%c0_13, %c6, %c0_14, %c0_15] : memref<1x20x2x128xf32, #tpu.memory_space<vmem>>, vector<1x1x2x128xf32>
    %22 = vector.shape_cast %21 : vector<1x1x2x128xf32> to vector<2x128xf32>
    %23 = vector.shape_cast %20 : vector<2x128xf32> to vector<1x1x2x128xf32>
    tpu.vector_store %arg3[%c0_13, %c6, %c0_14, %c0_15], %23 {strides = array<i32>} : memref<1x20x2x128xf32, #tpu.memory_space<vmem>>, vector<1x1x2x128xf32>,
    %24 = vector.extract_strided_slice %8 {offsets = [1, 0, 0], sizes = [1, 2, 128], strides = [1, 1, 1]} : vector<4x2x128xf32> to vector<1x2x128xf32>
    %25 = vector.shape_cast %24 : vector<1x2x128xf32> to vector<2x128xf32>
    %c0_16 = arith.constant 0 : index
    %c14 = arith.constant 14 : index
    %c0_17 = arith.constant 0 : index
    %c0_18 = arith.constant 0 : index
    %26 = vector.load %arg3[%c0_16, %c14, %c0_17, %c0_18] : memref<1x20x2x128xf32, #tpu.memory_space<vmem>>, vector<1x1x2x128xf32>
    %27 = vector.shape_cast %26 : vector<1x1x2x128xf32> to vector<2x128xf32>
    %28 = vector.shape_cast %25 : vector<2x128xf32> to vector<1x1x2x128xf32>
    tpu.vector_store %arg3[%c0_16, %c14, %c0_17, %c0_18], %28 {strides = array<i32>} : memref<1x20x2x128xf32, #tpu.memory_space<vmem>>, vector<1x1x2x128xf32>,
    %29 = vector.extract_strided_slice %7 {offsets = [2, 0, 0], sizes = [1, 2, 128], strides = [1, 1, 1]} : vector<4x2x128xf32> to vector<1x2x128xf32>
    %30 = vector.shape_cast %29 : vector<1x2x128xf32> to vector<2x128xf32>
    %c0_19 = arith.constant 0 : index
    %c8 = arith.constant 8 : index
    %c0_20 = arith.constant 0 : index
    %c0_21 = arith.constant 0 : index
    %31 = vector.load %arg3[%c0_19, %c8, %c0_20, %c0_21] : memref<1x20x2x128xf32, #tpu.memory_space<vmem>>, vector<1x1x2x128xf32>
    %32 = vector.shape_cast %31 : vector<1x1x2x128xf32> to vector<2x128xf32>
    %33 = vector.shape_cast %30 : vector<2x128xf32> to vector<1x1x2x128xf32>
    tpu.vector_store %arg3[%c0_19, %c8, %c0_20, %c0_21], %33 {strides = array<i32>} : memref<1x20x2x128xf32, #tpu.memory_space<vmem>>, vector<1x1x2x128xf32>,
    %34 = vector.extract_strided_slice %8 {offsets = [2, 0, 0], sizes = [1, 2, 128], strides = [1, 1, 1]} : vector<4x2x128xf32> to vector<1x2x128xf32>
    %35 = vector.shape_cast %34 : vector<1x2x128xf32> to vector<2x128xf32>
    %c0_22 = arith.constant 0 : index
    %c16 = arith.constant 16 : index
    %c0_23 = arith.constant 0 : index
    %c0_24 = arith.constant 0 : index
    %36 = vector.load %arg3[%c0_22, %c16, %c0_23, %c0_24] : memref<1x20x2x128xf32, #tpu.memory_space<vmem>>, vector<1x1x2x128xf32>
    %37 = vector.shape_cast %36 : vector<1x1x2x128xf32> to vector<2x128xf32>
    %38 = vector.shape_cast %35 : vector<2x128xf32> to vector<1x1x2x128xf32>
    tpu.vector_store %arg3[%c0_22, %c16, %c0_23, %c0_24], %38 {strides = array<i32>} : memref<1x20x2x128xf32, #tpu.memory_space<vmem>>, vector<1x1x2x128xf32>,
    %39 = vector.extract_strided_slice %7 {offsets = [3, 0, 0], sizes = [1, 2, 128], strides = [1, 1, 1]} : vector<4x2x128xf32> to vector<1x2x128xf32>
    %40 = vector.shape_cast %39 : vector<1x2x128xf32> to vector<2x128xf32>
    %c0_25 = arith.constant 0 : index
    %c10 = arith.constant 10 : index
    %c0_26 = arith.constant 0 : index
    %c0_27 = arith.constant 0 : index
    %41 = vector.load %arg3[%c0_25, %c10, %c0_26, %c0_27] : memref<1x20x2x128xf32, #tpu.memory_space<vmem>>, vector<1x1x2x128xf32>
    %42 = vector.shape_cast %41 : vector<1x1x2x128xf32> to vector<2x128xf32>
    %43 = vector.shape_cast %40 : vector<2x128xf32> to vector<1x1x2x128xf32>
    tpu.vector_store %arg3[%c0_25, %c10, %c0_26, %c0_27], %43 {strides = array<i32>} : memref<1x20x2x128xf32, #tpu.memory_space<vmem>>, vector<1x1x2x128xf32>,
    %44 = vector.extract_strided_slice %8 {offsets = [3, 0, 0], sizes = [1, 2, 128], strides = [1, 1, 1]} : vector<4x2x128xf32> to vector<1x2x128xf32>
    %45 = vector.shape_cast %44 : vector<1x2x128xf32> to vector<2x128xf32>
    %c0_28 = arith.constant 0 : index
    %c18 = arith.constant 18 : index
    %c0_29 = arith.constant 0 : index
    %c0_30 = arith.constant 0 : index
    %46 = vector.load %arg3[%c0_28, %c18, %c0_29, %c0_30] : memref<1x20x2x128xf32, #tpu.memory_space<vmem>>, vector<1x1x2x128xf32>
    %47 = vector.shape_cast %46 : vector<1x1x2x128xf32> to vector<2x128xf32>
    %48 = vector.shape_cast %45 : vector<2x128xf32> to vector<1x1x2x128xf32>
    tpu.vector_store %arg3[%c0_28, %c18, %c0_29, %c0_30], %48 {strides = array<i32>} : memref<1x20x2x128xf32, #tpu.memory_space<vmem>>, vector<1x1x2x128xf32>,
    %cst_31 = arith.constant 804.247741 : f32
    %49 = vector.broadcast %cst_31 : f32 to vector<4x2x128xf32>
    %50 = arith.mulf %1, %49 : vector<4x2x128xf32>
    %51 = math.sin %50 : vector<4x2x128xf32>
    %52 = math.cos %50 : vector<4x2x128xf32>
    %53 = vector.extract_strided_slice %51 {offsets = [0, 0, 0], sizes = [1, 2, 128], strides = [1, 1, 1]} : vector<4x2x128xf32> to vector<1x2x128xf32>
    %54 = vector.shape_cast %53 : vector<1x2x128xf32> to vector<2x128xf32>
    %c0_32 = arith.constant 0 : index
    %c5 = arith.constant 5 : index
    %c0_33 = arith.constant 0 : index
    %c0_34 = arith.constant 0 : index
    %55 = vector.load %arg3[%c0_32, %c5, %c0_33, %c0_34] : memref<1x20x2x128xf32, #tpu.memory_space<vmem>>, vector<1x1x2x128xf32>
    %56 = vector.shape_cast %55 : vector<1x1x2x128xf32> to vector<2x128xf32>
    %57 = vector.shape_cast %54 : vector<2x128xf32> to vector<1x1x2x128xf32>
    tpu.vector_store %arg3[%c0_32, %c5, %c0_33, %c0_34], %57 {strides = array<i32>} : memref<1x20x2x128xf32, #tpu.memory_space<vmem>>, vector<1x1x2x128xf32>,
    %58 = vector.extract_strided_slice %52 {offsets = [0, 0, 0], sizes = [1, 2, 128], strides = [1, 1, 1]} : vector<4x2x128xf32> to vector<1x2x128xf32>
    %59 = vector.shape_cast %58 : vector<1x2x128xf32> to vector<2x128xf32>
    %c0_35 = arith.constant 0 : index
    %c13 = arith.constant 13 : index
    %c0_36 = arith.constant 0 : index
    %c0_37 = arith.constant 0 : index
    %60 = vector.load %arg3[%c0_35, %c13, %c0_36, %c0_37] : memref<1x20x2x128xf32, #tpu.memory_space<vmem>>, vector<1x1x2x128xf32>
    %61 = vector.shape_cast %60 : vector<1x1x2x128xf32> to vector<2x128xf32>
    %62 = vector.shape_cast %59 : vector<2x128xf32> to vector<1x1x2x128xf32>
    tpu.vector_store %arg3[%c0_35, %c13, %c0_36, %c0_37], %62 {strides = array<i32>} : memref<1x20x2x128xf32, #tpu.memory_space<vmem>>, vector<1x1x2x128xf32>,
    %63 = vector.extract_strided_slice %51 {offsets = [1, 0, 0], sizes = [1, 2, 128], strides = [1, 1, 1]} : vector<4x2x128xf32> to vector<1x2x128xf32>
    %64 = vector.shape_cast %63 : vector<1x2x128xf32> to vector<2x128xf32>
    %c0_38 = arith.constant 0 : index
    %c7 = arith.constant 7 : index
    %c0_39 = arith.constant 0 : index
    %c0_40 = arith.constant 0 : index
    %65 = vector.load %arg3[%c0_38, %c7, %c0_39, %c0_40] : memref<1x20x2x128xf32, #tpu.memory_space<vmem>>, vector<1x1x2x128xf32>
    %66 = vector.shape_cast %65 : vector<1x1x2x128xf32> to vector<2x128xf32>
    %67 = vector.shape_cast %64 : vector<2x128xf32> to vector<1x1x2x128xf32>
    tpu.vector_store %arg3[%c0_38, %c7, %c0_39, %c0_40], %67 {strides = array<i32>} : memref<1x20x2x128xf32, #tpu.memory_space<vmem>>, vector<1x1x2x128xf32>,
    %68 = vector.extract_strided_slice %52 {offsets = [1, 0, 0], sizes = [1, 2, 128], strides = [1, 1, 1]} : vector<4x2x128xf32> to vector<1x2x128xf32>
    %69 = vector.shape_cast %68 : vector<1x2x128xf32> to vector<2x128xf32>
    %c0_41 = arith.constant 0 : index
    %c15 = arith.constant 15 : index
    %c0_42 = arith.constant 0 : index
    %c0_43 = arith.constant 0 : index
    %70 = vector.load %arg3[%c0_41, %c15, %c0_42, %c0_43] : memref<1x20x2x128xf32, #tpu.memory_space<vmem>>, vector<1x1x2x128xf32>
    %71 = vector.shape_cast %70 : vector<1x1x2x128xf32> to vector<2x128xf32>
    %72 = vector.shape_cast %69 : vector<2x128xf32> to vector<1x1x2x128xf32>
    tpu.vector_store %arg3[%c0_41, %c15, %c0_42, %c0_43], %72 {strides = array<i32>} : memref<1x20x2x128xf32, #tpu.memory_space<vmem>>, vector<1x1x2x128xf32>,
    %73 = vector.extract_strided_slice %51 {offsets = [2, 0, 0], sizes = [1, 2, 128], strides = [1, 1, 1]} : vector<4x2x128xf32> to vector<1x2x128xf32>
    %74 = vector.shape_cast %73 : vector<1x2x128xf32> to vector<2x128xf32>
    %c0_44 = arith.constant 0 : index
    %c9 = arith.constant 9 : index
    %c0_45 = arith.constant 0 : index
    %c0_46 = arith.constant 0 : index
    %75 = vector.load %arg3[%c0_44, %c9, %c0_45, %c0_46] : memref<1x20x2x128xf32, #tpu.memory_space<vmem>>, vector<1x1x2x128xf32>
    %76 = vector.shape_cast %75 : vector<1x1x2x128xf32> to vector<2x128xf32>
    %77 = vector.shape_cast %74 : vector<2x128xf32> to vector<1x1x2x128xf32>
    tpu.vector_store %arg3[%c0_44, %c9, %c0_45, %c0_46], %77 {strides = array<i32>} : memref<1x20x2x128xf32, #tpu.memory_space<vmem>>, vector<1x1x2x128xf32>,
    %78 = vector.extract_strided_slice %52 {offsets = [2, 0, 0], sizes = [1, 2, 128], strides = [1, 1, 1]} : vector<4x2x128xf32> to vector<1x2x128xf32>
    %79 = vector.shape_cast %78 : vector<1x2x128xf32> to vector<2x128xf32>
    %c0_47 = arith.constant 0 : index
    %c17 = arith.constant 17 : index
    %c0_48 = arith.constant 0 : index
    %c0_49 = arith.constant 0 : index
    %80 = vector.load %arg3[%c0_47, %c17, %c0_48, %c0_49] : memref<1x20x2x128xf32, #tpu.memory_space<vmem>>, vector<1x1x2x128xf32>
    %81 = vector.shape_cast %80 : vector<1x1x2x128xf32> to vector<2x128xf32>
    %82 = vector.shape_cast %79 : vector<2x128xf32> to vector<1x1x2x128xf32>
    tpu.vector_store %arg3[%c0_47, %c17, %c0_48, %c0_49], %82 {strides = array<i32>} : memref<1x20x2x128xf32, #tpu.memory_space<vmem>>, vector<1x1x2x128xf32>,
    %83 = vector.extract_strided_slice %51 {offsets = [3, 0, 0], sizes = [1, 2, 128], strides = [1, 1, 1]} : vector<4x2x128xf32> to vector<1x2x128xf32>
    %84 = vector.shape_cast %83 : vector<1x2x128xf32> to vector<2x128xf32>
    %c0_50 = arith.constant 0 : index
    %c11 = arith.constant 11 : index
    %c0_51 = arith.constant 0 : index
    %c0_52 = arith.constant 0 : index
    %85 = vector.load %arg3[%c0_50, %c11, %c0_51, %c0_52] : memref<1x20x2x128xf32, #tpu.memory_space<vmem>>, vector<1x1x2x128xf32>
    %86 = vector.shape_cast %85 : vector<1x1x2x128xf32> to vector<2x128xf32>
    %87 = vector.shape_cast %84 : vector<2x128xf32> to vector<1x1x2x128xf32>
    tpu.vector_store %arg3[%c0_50, %c11, %c0_51, %c0_52], %87 {strides = array<i32>} : memref<1x20x2x128xf32, #tpu.memory_space<vmem>>, vector<1x1x2x128xf32>,
    %88 = vector.extract_strided_slice %52 {offsets = [3, 0, 0], sizes = [1, 2, 128], strides = [1, 1, 1]} : vector<4x2x128xf32> to vector<1x2x128xf32>
    %89 = vector.shape_cast %88 : vector<1x2x128xf32> to vector<2x128xf32>
    %c0_53 = arith.constant 0 : index
    %c19 = arith.constant 19 : index
    %c0_54 = arith.constant 0 : index
    %c0_55 = arith.constant 0 : index
    %90 = vector.load %arg3[%c0_53, %c19, %c0_54, %c0_55] : memref<1x20x2x128xf32, #tpu.memory_space<vmem>>, vector<1x1x2x128xf32>
    %91 = vector.shape_cast %90 : vector<1x1x2x128xf32> to vector<2x128xf32>
    %92 = vector.shape_cast %89 : vector<2x128xf32> to vector<1x1x2x128xf32>
    tpu.vector_store %arg3[%c0_53, %c19, %c0_54, %c0_55], %92 {strides = array<i32>} : memref<1x20x2x128xf32, #tpu.memory_space<vmem>>, vector<1x1x2x128xf32>,
    return
  }
  func.func @transform_0(%arg0: i32, %arg1: i32) -> (i32, i32, i32, i32) {
    %c0_i32 = arith.constant 0 : i32
    %c0_i32_0 = arith.constant 0 : i32
    %c0_i32_1 = arith.constant 0 : i32
    return %arg0, %c0_i32, %arg1, %c0_i32_0 : i32, i32, i32, i32
  }
  func.func @transform_1(%arg0: i32, %arg1: i32) -> (i32, i32, i32, i32) {
    %c0_i32 = arith.constant 0 : i32
    %c0_i32_0 = arith.constant 0 : i32
    %c0_i32_1 = arith.constant 0 : i32
    return %arg0, %c0_i32, %arg1, %c0_i32_0 : i32, i32, i32, i32
  }
}

</mosaic_0001>

<llo_original>
// kernel: tpu_custom_call.1
$region0: #{tpu_custom_call.1}
  #allocation0 [shape = 'u32[]', space=smem, size = 0x4, offset = 0x4, fixed_abs, tag = 'smem constant byte address 0x4 - core index']
  #allocation1 [shape = 'u32[144,128]{1,0:T(1,128)}', space=vmem, size = 0x12000, scoped, tag = 'internal scratch']
  %s0 = inlined_call_operand.hbm [shape: f32[2,4,2,128], index: 0, kind: input, shape index: {}]
  %s1 = inlined_call_operand.hbm [shape: f32[2,20,2,128], index: 1, kind: output, shape index: {}]
  %s2 = sld [smem:[#allocation0]]
  $region41: #{tpu_custom_call.1} parent=0
    _
  %s4 = ssub.s32 1, %s2
  %s5 = scalar_select 0, %s4, %s2
  $region1: #{tpu_custom_call.1} parent=0
    #allocation2 [shape = 'u8[8192]{0}', space=vmem, size = 0x2000, scoped, tag = 'input window, operand 0']
    #allocation3 [shape = 's32[2]{0}', space=sflag, size = 0x8, scoped, tag = 'scoped memory for tpu_custom_call.1']
    #allocation4 [shape = 's32[2]{0}', space=sflag, size = 0x8, scoped, tag = 'scoped memory for tpu_custom_call.1']
    #allocation5 [shape = 'u8[40960]{0}', space=vmem, size = 0xa000, scoped, tag = 'output window, operand 0']
    %6 = vsyncpa [#allocation3], 0
    %s7 = scalar_lea.sflag [#allocation3], 1
    %8 = vsyncpa %s7, 0
    %9 = vsyncpa [#allocation4], 0
    %s10 = scalar_lea.sflag [#allocation4], 1
    %11 = vsyncpa %s10, 0
    loop: start=0, step=1, limit=4
    $region2: #{tpu_custom_call.1} parent=1 // loop_pre_header
      _
    $region3: #{tpu_custom_call.1} parent=1 // loop_header
      %s13 = sphi 0, %s17
      %p14 = scmp.ge.s32.totalorder %s13, 4
      %s20 = sphi 0, %s32
      %s21 = sphi 0, %s28
      %s22 = sphi 0, %s20
      %s23 = sphi 0, %s21
      %s24 = sphi 0, %s22
      %s25 = sphi 0, %s23
      %s37 = sphi 0, %s39
      %s40 = sphi 0, %s37
      %s41 = sphi 0, %s40
      %s57 = sphi 0, %s41
      %s65 = sphi 0, %s67
      %s68 = sphi 0, %s65
      %s69 = sphi 0, %s68
      %s85 = sphi 0, %s69
    $region4: #{tpu_custom_call.1} parent=1 // loop_header_branch
      %16 = sbr.rel (%p14) target = $region8
    $region5: #{tpu_custom_call.1} parent=1 // loop_body
      %s18 = ssub.s32 %s13, 1
      %s19 = ssub.s32 %s13, 2
      %s26 = sadd.s32 1, %s21
      %p27 = scmp.ge.s32.totalorder %s26, 1
      %s28 = scalar_select %p27, 0, %s26
      %s29 = sadd.s32 1, %s20
      %s30 = scalar_select %p27, %s29, %s20
      %p31 = scmp.ge.s32.totalorder %s30, 2
      %s32 = scalar_select %p31, 0, %s30
      %s33 = ssub.s32 %s20, %s32
      %s34 = ssub.s32 %s21, %s28
      %s35 = sor.u32 %s33, %s34
      %p36 = scmp.eq.s32.totalorder %s35, 0
      %s38 = sadd.s32 %s37, 1
      %s39 = scalar_select %p36, %s37, %s38
      %p42 = pneg %p36
      %p43 = scmp.eq.s32.totalorder %s13, 1
      %p44 = por %p42, %p43
      %p45 = scmp.ne.s32.totalorder %s37, %s40
      %p46 = scmp.eq.s32.totalorder %s13, 0
      %p47 = por %p45, %p46
      %p48 = scmp.ne.s32.totalorder %s37, %s40
      %p49 = scmp.eq.s32.totalorder %s18, 1
      %p50 = por %p48, %p49
      %p51 = scmp.ne.s32.totalorder %s40, %s41
      %p52 = scmp.eq.s32.totalorder %s18, 0
      %p53 = por %p51, %p52
      %p54 = scmp.ne.s32.totalorder %s40, %s41
      %p55 = scmp.eq.s32.totalorder %s19, 1
      %p56 = por %p54, %p55
      %p58 = scmp.ne.s32.totalorder %s41, %s57
      %p59 = scmp.eq.s32.totalorder %s19, 0
      %p60 = por %p58, %p59
      %s61 = ssub.s32 %s20, %s32
      %s62 = ssub.s32 %s21, %s28
      %s63 = sor.u32 %s61, %s62
      %p64 = scmp.eq.s32.totalorder %s63, 0
      %s66 = sadd.s32 %s65, 1
      %s67 = scalar_select %p64, %s65, %s66
      %p70 = pneg %p64
      %p71 = scmp.eq.s32.totalorder %s13, 1
      %p72 = por %p70, %p71
      %p73 = scmp.ne.s32.totalorder %s65, %s68
      %p74 = scmp.eq.s32.totalorder %s13, 0
      %p75 = por %p73, %p74
      %p76 = scmp.ne.s32.totalorder %s65, %s68
      %p77 = scmp.eq.s32.totalorder %s18, 1
      %p78 = por %p76, %p77
      %p79 = scmp.ne.s32.totalorder %s68, %s69
      %p80 = scmp.eq.s32.totalorder %s18, 0
      %p81 = por %p79, %p80
      %p82 = scmp.ne.s32.totalorder %s68, %s69
      %p83 = scmp.eq.s32.totalorder %s19, 1
      %p84 = por %p82, %p83
      %p86 = scmp.ne.s32.totalorder %s69, %s85
      %p87 = scmp.eq.s32.totalorder %s19, 0
      %p88 = por %p86, %p87
      %p89 = scmp.le.s32.totalorder 1, %s13
      %p90 = scmp.lt.s32.totalorder %s13, 3
      %p91 = pnand %p89, %p90
      %p92 = pneg %p91
      // Predicated region
      $region9: #{tpu_custom_call.1} parent=5 // pred_check
        _
      $region10: #{tpu_custom_call.1} parent=5 // pred_check_branch
        %94 = sbr.rel (%p91) target = $region12
      $region11: #{tpu_custom_call.1} parent=5 // pred_region
        %s95 = ssub.s32 %s13, 1
      $region12: #{tpu_custom_call.1} parent=5 // pred_fallthru
        _
      %p96 = scmp.lt.s32.totalorder %s13, 2
      // Predicated region
      $region13: #{tpu_custom_call.1} parent=5 // pred_check
        %p97 = pneg %p96
      $region14: #{tpu_custom_call.1} parent=5 // pred_check_branch
        %99 = sbr.rel (%p97) target = $region16
      $region15: #{tpu_custom_call.1} parent=5 // pred_region
        // Predicated region
        $region17: #{tpu_custom_call.1} parent=15 // pred_check
          %p100 = pneg %p47
        $region18: #{tpu_custom_call.1} parent=15 // pred_check_branch
          %102 = sbr.rel (%p100) target = $region20
        $region19: #{tpu_custom_call.1} parent=15 // pred_region
          %s103 = sand.u32 %s37, 1
          %s104 = scalar_lea.sflag [#allocation3], %s103
          %s105 = sand.u32 %s37, 1
          %s106 = smul.addr %s105, 8
          %s107 = scalar_lea.vmem [#allocation2], %s106
          %s109 = ssub.s32 128, 128
          %110 = vsyncadd %s104, %s109
          %s111 = smul.addr %s20, 4
          %s112 = sadd.s32 %s21, %s111
          %s113 = smul.addr %s112, 32
          %s114 = scalar_lea.hbm %s0, %s113
          %s115 = sshll.u32 %s107, 4
          %s116 = int_to_ptr.vmem [resolvable:$true] %s115
          %121 = dma.hbm_to_vmem [thread:$0]  %s114, 128, %s116, %s104, 32, 32, 2
        $region20: #{tpu_custom_call.1} parent=15 // pred_fallthru
          _
      $region16: #{tpu_custom_call.1} parent=5 // pred_fallthru
        _
      %p122 = scmp.le.s32.totalorder 1, %s13
      %p123 = scmp.lt.s32.totalorder %s13, 3
      %p124 = pnand %p122, %p123
      %p125 = pneg %p124
      // Predicated region
      $region21: #{tpu_custom_call.1} parent=5 // pred_check
        _
      $region22: #{tpu_custom_call.1} parent=5 // pred_check_branch
        %127 = sbr.rel (%p124) target = $region24
      $region23: #{tpu_custom_call.1} parent=5 // pred_region
        %s128 = ssub.s32 %s13, 1
        %s129 = sand.u32 %s40, 1
        %s130 = scalar_lea.sflag [#allocation3], %s129
        %s131 = sand.u32 %s40, 1
        %s132 = smul.addr %s131, 8
        %s133 = scalar_lea.vmem [#allocation2], %s132
        // Predicated region
        $region25: #{tpu_custom_call.1} parent=23 // pred_check
          %p134 = pneg %p53
        $region26: #{tpu_custom_call.1} parent=23 // pred_check_branch
          %136 = sbr.rel (%p134) target = $region28
        $region27: #{tpu_custom_call.1} parent=23 // pred_region
          %137 = dma.done %s130, 128
        $region28: #{tpu_custom_call.1} parent=23 // pred_fallthru
          _
        %s138 = sand.u32 %s40, 1
        %s139 = scalar_lea.sflag [#allocation3], %s138
        %s140 = sand.u32 %s40, 1
        %s141 = smul.addr %s140, 8
        %s142 = scalar_lea.vmem [#allocation2], %s141
        %p143 = pneg %p53
        %p144 = pneg %p50
        %p145 = pneg %p81
        %p146 = pneg %p78
        %s147 = sand.u32 %s68, 1
        %s148 = scalar_lea.sflag [#allocation4], %s147
        %s149 = sand.u32 %s68, 1
        %s150 = smul.addr %s149, 40
        %s151 = scalar_lea.vmem [#allocation5], %s150
        %v152 = vld [vmem:[%s133] sm:$0x3]
        %v153 = vld [vmem:[%s133 + $0x2] sm:$0x3]
        %v154 = vld [vmem:[%s133 + $0x4] sm:$0x3]
        %v155 = vld [vmem:[%s133 + $0x6] sm:$0x3]
        %156 = vst [vmem:[%s151] sm:$0x3] %v152
        %157 = vst [vmem:[%s151 + $0x2] sm:$0x3] %v153
        %158 = vst [vmem:[%s151 + $0x4] sm:$0x3] %v154
        %159 = vst [vmem:[%s151 + $0x6] sm:$0x3] %v155
        %v160 = vmul.f32 %v152, 402.12387
        %v161 = vmul.f32 %v153, 402.12387
        %v162 = vmul.f32 %v154, 402.12387
        %v163 = vmul.f32 %v155, 402.12387
        %v164 = vand.u32 2147483647, %v160
        %vm165 = vcmp.le.f32.partialorder %v164, 0.7853982
        %vm166 = vcmp.lt.s32.totalorder %v160, 0
        %v167 = vand.u32 %v160, 2139095040
        %v168 = vshrl.u32 %v167, 23
        %v169 = vsub.s32 %v168, 127
        %v170 = vand.u32 2147483647, %v160
        %v171 = vand.u32 %v170, 8388607
        %v172 = vor.u32 %v171, 8388608
        %v173 = vsub.s32 0, %v172
        %v174 = vadd.s32 %v169, 1
        %vm175 = vcmp.gt.s32.totalorder %v174, 0
        %v176 = vsel %vm175, %v174, 0
        %v177 = vshrl.u32 %v176, 5
        %v178 = vand.u32 %v176, 31
        %v179 = vsub.s32 32, %v178
        %v180 = vshrl.u32 683565275, %v179
        %v181 = vshll.u32 683565275, %v178
        %v182 = vshrl.u32 2475754826, %v179
        %v183 = vor.u32 %v181, %v182
        %v184 = vshll.u32 2475754826, %v178
        %v185 = vshrl.u32 2131351028, %v179
        %v186 = vor.u32 %v184, %v185
        %v187 = vshll.u32 2131351028, %v178
        %v188 = vshrl.u32 2102212464, %v179
        %v189 = vor.u32 %v187, %v188
        %v190 = vshll.u32 2102212464, %v178
        %v191 = vshrl.u32 920167782, %v179
        %v192 = vor.u32 %v190, %v191
        %v193 = vshll.u32 920167782, %v178
        %v194 = vshrl.u32 1326507024, %v179
        %v195 = vor.u32 %v193, %v194
        %vm196 = vcmp.lt.s32.totalorder %v177, 1
        %vm197 = vcmp.lt.s32.totalorder %v177, 2
        %vm198 = vcmp.lt.s32.totalorder %v177, 3
        %vm199 = vcmp.lt.s32.totalorder %v177, 4
        %v200 = vsel %vm196, %v180, %v183
        %v201 = vsel %vm199, %v189, 2102212464
        %v202 = vsel %vm198, %v186, %v201
        %v203 = vsel %vm197, %v200, %v202
        %v204 = vsel %vm196, %v183, %v186
        %v205 = vsel %vm199, %v192, 920167782
        %v206 = vsel %vm198, %v189, %v205
        %v207 = vsel %vm197, %v204, %v206
        %v208 = vsel %vm196, %v186, %v189
        %v209 = vsel %vm199, %v195, 1326507024
        %v210 = vsel %vm198, %v192, %v209
        %v211 = vsel %vm197, %v208, %v210
        %v212 = vshll.u32 %v172, 8
        %v213 = vmul.u32.u64.compose %v212, %v211
        %v214 = vextract.low.u32 %v213
        %v215 = vextract.high.u32 %v213
        %v216 = vmul.u32.u64.compose %v212, %v207
        %v217 = vextract.low.u32 %v216
        %v218 = vextract.high.u32 %v216
        %v219 = vmul.u32 %v212, %v203
        %v220 = vadd.s32 %v215, %v217
        %vm221 = vc.u32 %v215, %v217
        %v222 = vadd.s32 %v218, 1
        %v223 = vsel %vm221, %v222, %v218
        %v224 = vadd.s32 %v219, %v223
        %v225 = vadd.s32 %v224, 536870912
        %v226 = vshrl.u32 %v225, 30
        %v227 = vshll.u32 %v226, 30
        %v228 = vsub.s32 %v224, %v227
        %vm229 = vcmp.lt.s32.totalorder %v228, 0
        %v230 = vsub.s32 0, %v228
        %v231 = vsel %vm229, %v230, %v228
        %v232 = vclz %v231
        %v233 = vsub.s32 %v232, 2
        %vm234 = vcmp.gt.s32.totalorder 0, %v233
        %v235 = vsel %vm234, 0, %v233
        %v236 = vsub.s32 32, %v235
        %v237 = vshll.u32 %v228, %v235
        %v238 = vshrl.u32 %v220, %v236
        %v239 = vor.u32 %v237, %v238
        %v240 = vsub.s32 4294967266, %v235
        %v241 = vadd.s32 %v240, 127
        %v242 = vshll.u32 %v241, 23
        %v243 = vor.u32 4788187, %v242
        %v244 = vand.u32 2147483647, %v243
        %v246 = vcvt.s32.f32 %v239
        %v247 = vmul.f32 %v246, %v244
        %v248 = vxor.u32 %v247, 2147483648
        %v249 = vsel %vm166, %v248, %v247
        %v250 = vsub.s32 4, %v226
        %v251 = vsel %vm166, %v250, %v226
        %v252 = vsel %vm165, %v160, %v249
        %v253 = vsel %vm165, 0, %v251
        %v254 = vcosq.f32.pop %v252
        %v255 = vsinq.f32.pop %v252
        %vm256 = vweird.f32 %v160
        %v257 = vadd.s32 %v253, 3
        %v258 = vand.u32 %v257, 3
        %vm259 = vcmp.lt.s32.totalorder %v258, 2
        %vm260 = vcmp.eq.s32.totalorder %v258, 0
        %v261 = vxor.u32 %v255, 2147483648
        %v262 = vsel %vm260, %v254, %v261
        %vm263 = vcmp.eq.s32.totalorder %v258, 2
        %v264 = vxor.u32 %v254, 2147483648
        %v265 = vsel %vm263, %v264, %v255
        %v266 = vsel %vm259, %v262, %v265
        %v267 = vsel %vm256, nan, %v266
        %v268 = vand.u32 2147483647, %v161
        %vm269 = vcmp.le.f32.partialorder %v268, 0.7853982
        %vm270 = vcmp.lt.s32.totalorder %v161, 0
        %v271 = vand.u32 %v161, 2139095040
        %v272 = vshrl.u32 %v271, 23
        %v273 = vsub.s32 %v272, 127
        %v274 = vand.u32 2147483647, %v161
        %v275 = vand.u32 %v274, 8388607
        %v276 = vor.u32 %v275, 8388608
        %v277 = vsub.s32 0, %v276
        %v278 = vadd.s32 %v273, 1
        %vm279 = vcmp.gt.s32.totalorder %v278, 0
        %v280 = vsel %vm279, %v278, 0
        %v281 = vshrl.u32 %v280, 5
        %v282 = vand.u32 %v280, 31
        %v283 = vsub.s32 32, %v282
        %v284 = vshrl.u32 683565275, %v283
        %v285 = vshll.u32 683565275, %v282
        %v286 = vshrl.u32 2475754826, %v283
        %v287 = vor.u32 %v285, %v286
        %v288 = vshll.u32 2475754826, %v282
        %v289 = vshrl.u32 2131351028, %v283
        %v290 = vor.u32 %v288, %v289
        %v291 = vshll.u32 2131351028, %v282
        %v292 = vshrl.u32 2102212464, %v283
        %v293 = vor.u32 %v291, %v292
        %v294 = vshll.u32 2102212464, %v282
        %v295 = vshrl.u32 920167782, %v283
        %v296 = vor.u32 %v294, %v295
        %v297 = vshll.u32 920167782, %v282
        %v298 = vshrl.u32 1326507024, %v283
        %v299 = vor.u32 %v297, %v298
        %vm300 = vcmp.lt.s32.totalorder %v281, 1
        %vm301 = vcmp.lt.s32.totalorder %v281, 2
        %vm302 = vcmp.lt.s32.totalorder %v281, 3
        %vm303 = vcmp.lt.s32.totalorder %v281, 4
        %v304 = vsel %vm300, %v284, %v287
        %v305 = vsel %vm303, %v293, 2102212464
        %v306 = vsel %vm302, %v290, %v305
        %v307 = vsel %vm301, %v304, %v306
        %v308 = vsel %vm300, %v287, %v290
        %v309 = vsel %vm303, %v296, 920167782
        %v310 = vsel %vm302, %v293, %v309
        %v311 = vsel %vm301, %v308, %v310
        %v312 = vsel %vm300, %v290, %v293
        %v313 = vsel %vm303, %v299, 1326507024
        %v314 = vsel %vm302, %v296, %v313
        %v315 = vsel %vm301, %v312, %v314
        %v316 = vshll.u32 %v276, 8
        %v317 = vmul.u32.u64.compose %v316, %v315
        %v318 = vextract.low.u32 %v317
        %v319 = vextract.high.u32 %v317
        %v320 = vmul.u32.u64.compose %v316, %v311
        %v321 = vextract.low.u32 %v320
        %v322 = vextract.high.u32 %v320
        %v323 = vmul.u32 %v316, %v307
        %v324 = vadd.s32 %v319, %v321
        %vm325 = vc.u32 %v319, %v321
        %v326 = vadd.s32 %v322, 1
        %v327 = vsel %vm325, %v326, %v322
        %v328 = vadd.s32 %v323, %v327
        %v329 = vadd.s32 %v328, 536870912
        %v330 = vshrl.u32 %v329, 30
        %v331 = vshll.u32 %v330, 30
        %v332 = vsub.s32 %v328, %v331
        %vm333 = vcmp.lt.s32.totalorder %v332, 0
        %v334 = vsub.s32 0, %v332
        %v335 = vsel %vm333, %v334, %v332
        %v336 = vclz %v335
        %v337 = vsub.s32 %v336, 2
        %vm338 = vcmp.gt.s32.totalorder 0, %v337
        %v339 = vsel %vm338, 0, %v337
        %v340 = vsub.s32 32, %v339
        %v341 = vshll.u32 %v332, %v339
        %v342 = vshrl.u32 %v324, %v340
        %v343 = vor.u32 %v341, %v342
        %v344 = vsub.s32 4294967266, %v339
        %v345 = vadd.s32 %v344, 127
        %v346 = vshll.u32 %v345, 23
        %v347 = vor.u32 4788187, %v346
        %v348 = vand.u32 2147483647, %v347
        %v350 = vcvt.s32.f32 %v343
        %v351 = vmul.f32 %v350, %v348
        %v352 = vxor.u32 %v351, 2147483648
        %v353 = vsel %vm270, %v352, %v351
        %v354 = vsub.s32 4, %v330
        %v355 = vsel %vm270, %v354, %v330
        %v356 = vsel %vm269, %v161, %v353
        %v357 = vsel %vm269, 0, %v355
        %v358 = vcosq.f32.pop %v356
        %v359 = vsinq.f32.pop %v356
        %vm360 = vweird.f32 %v161
        %v361 = vadd.s32 %v357, 3
        %v362 = vand.u32 %v361, 3
        %vm363 = vcmp.lt.s32.totalorder %v362, 2
        %vm364 = vcmp.eq.s32.totalorder %v362, 0
        %v365 = vxor.u32 %v359, 2147483648
        %v366 = vsel %vm364, %v358, %v365
        %vm367 = vcmp.eq.s32.totalorder %v362, 2
        %v368 = vxor.u32 %v358, 2147483648
        %v369 = vsel %vm367, %v368, %v359
        %v370 = vsel %vm363, %v366, %v369
        %v371 = vsel %vm360, nan, %v370
        %v372 = vand.u32 2147483647, %v162
        %vm373 = vcmp.le.f32.partialorder %v372, 0.7853982
        %vm374 = vcmp.lt.s32.totalorder %v162, 0
        %v375 = vand.u32 %v162, 2139095040
        %v376 = vshrl.u32 %v375, 23
        %v377 = vsub.s32 %v376, 127
        %v378 = vand.u32 2147483647, %v162
        %v379 = vand.u32 %v378, 8388607
        %v380 = vor.u32 %v379, 8388608
        %v381 = vsub.s32 0, %v380
        %v382 = vadd.s32 %v377, 1
        %vm383 = vcmp.gt.s32.totalorder %v382, 0
        %v384 = vsel %vm383, %v382, 0
        %v385 = vshrl.u32 %v384, 5
        %v386 = vand.u32 %v384, 31
        %v387 = vsub.s32 32, %v386
        %v388 = vshrl.u32 683565275, %v387
        %v389 = vshll.u32 683565275, %v386
        %v390 = vshrl.u32 2475754826, %v387
        %v391 = vor.u32 %v389, %v390
        %v392 = vshll.u32 2475754826, %v386
        %v393 = vshrl.u32 2131351028, %v387
        %v394 = vor.u32 %v392, %v393
        %v395 = vshll.u32 2131351028, %v386
        %v396 = vshrl.u32 2102212464, %v387
        %v397 = vor.u32 %v395, %v396
        %v398 = vshll.u32 2102212464, %v386
        %v399 = vshrl.u32 920167782, %v387
        %v400 = vor.u32 %v398, %v399
        %v401 = vshll.u32 920167782, %v386
        %v402 = vshrl.u32 1326507024, %v387
        %v403 = vor.u32 %v401, %v402
        %vm404 = vcmp.lt.s32.totalorder %v385, 1
        %vm405 = vcmp.lt.s32.totalorder %v385, 2
        %vm406 = vcmp.lt.s32.totalorder %v385, 3
        %vm407 = vcmp.lt.s32.totalorder %v385, 4
        %v408 = vsel %vm404, %v388, %v391
        %v409 = vsel %vm407, %v397, 2102212464
        %v410 = vsel %vm406, %v394, %v409
        %v411 = vsel %vm405, %v408, %v410
        %v412 = vsel %vm404, %v391, %v394
        %v413 = vsel %vm407, %v400, 920167782
        %v414 = vsel %vm406, %v397, %v413
        %v415 = vsel %vm405, %v412, %v414
        %v416 = vsel %vm404, %v394, %v397
        %v417 = vsel %vm407, %v403, 1326507024
        %v418 = vsel %vm406, %v400, %v417
        %v419 = vsel %vm405, %v416, %v418
        %v420 = vshll.u32 %v380, 8
        %v421 = vmul.u32.u64.compose %v420, %v419
        %v422 = vextract.low.u32 %v421
        %v423 = vextract.high.u32 %v421
        %v424 = vmul.u32.u64.compose %v420, %v415
        %v425 = vextract.low.u32 %v424
        %v426 = vextract.high.u32 %v424
        %v427 = vmul.u32 %v420, %v411
        %v428 = vadd.s32 %v423, %v425
        %vm429 = vc.u32 %v423, %v425
        %v430 = vadd.s32 %v426, 1
        %v431 = vsel %vm429, %v430, %v426
        %v432 = vadd.s32 %v427, %v431
        %v433 = vadd.s32 %v432, 536870912
        %v434 = vshrl.u32 %v433, 30
        %v435 = vshll.u32 %v434, 30
        %v436 = vsub.s32 %v432, %v435
        %vm437 = vcmp.lt.s32.totalorder %v436, 0
        %v438 = vsub.s32 0, %v436
        %v439 = vsel %vm437, %v438, %v436
        %v440 = vclz %v439
        %v441 = vsub.s32 %v440, 2
        %vm442 = vcmp.gt.s32.totalorder 0, %v441
        %v443 = vsel %vm442, 0, %v441
        %v444 = vsub.s32 32, %v443
        %v445 = vshll.u32 %v436, %v443
        %v446 = vshrl.u32 %v428, %v444
        %v447 = vor.u32 %v445, %v446
        %v448 = vsub.s32 4294967266, %v443
        %v449 = vadd.s32 %v448, 127
        %v450 = vshll.u32 %v449, 23
        %v451 = vor.u32 4788187, %v450
        %v452 = vand.u32 2147483647, %v451
        %v454 = vcvt.s32.f32 %v447
        %v455 = vmul.f32 %v454, %v452
        %v456 = vxor.u32 %v455, 2147483648
        %v457 = vsel %vm374, %v456, %v455
        %v458 = vsub.s32 4, %v434
        %v459 = vsel %vm374, %v458, %v434
        %v460 = vsel %vm373, %v162, %v457
        %v461 = vsel %vm373, 0, %v459
        %v462 = vcosq.f32.pop %v460
        %v463 = vsinq.f32.pop %v460
        %vm464 = vweird.f32 %v162
        %v465 = vadd.s32 %v461, 3
        %v466 = vand.u32 %v465, 3
        %vm467 = vcmp.lt.s32.totalorder %v466, 2
        %vm468 = vcmp.eq.s32.totalorder %v466, 0
        %v469 = vxor.u32 %v463, 2147483648
        %v470 = vsel %vm468, %v462, %v469
        %vm471 = vcmp.eq.s32.totalorder %v466, 2
        %v472 = vxor.u32 %v462, 2147483648
        %v473 = vsel %vm471, %v472, %v463
        %v474 = vsel %vm467, %v470, %v473
        %v475 = vsel %vm464, nan, %v474
        %v476 = vand.u32 2147483647, %v163
        %vm477 = vcmp.le.f32.partialorder %v476, 0.7853982
        %vm478 = vcmp.lt.s32.totalorder %v163, 0
        %v479 = vand.u32 %v163, 2139095040
        %v480 = vshrl.u32 %v479, 23
        %v481 = vsub.s32 %v480, 127
        %v482 = vand.u32 2147483647, %v163
        %v483 = vand.u32 %v482, 8388607
        %v484 = vor.u32 %v483, 8388608
        %v485 = vsub.s32 0, %v484
        %v486 = vadd.s32 %v481, 1
        %vm487 = vcmp.gt.s32.totalorder %v486, 0
        %v488 = vsel %vm487, %v486, 0
        %v489 = vshrl.u32 %v488, 5
        %v490 = vand.u32 %v488, 31
        %v491 = vsub.s32 32, %v490
        %v492 = vshrl.u32 683565275, %v491
        %v493 = vshll.u32 683565275, %v490
        %v494 = vshrl.u32 2475754826, %v491
        %v495 = vor.u32 %v493, %v494
        %v496 = vshll.u32 2475754826, %v490
        %v497 = vshrl.u32 2131351028, %v491
        %v498 = vor.u32 %v496, %v497
        %v499 = vshll.u32 2131351028, %v490
        %v500 = vshrl.u32 2102212464, %v491
        %v501 = vor.u32 %v499, %v500
        %v502 = vshll.u32 2102212464, %v490
        %v503 = vshrl.u32 920167782, %v491
        %v504 = vor.u32 %v502, %v503
        %v505 = vshll.u32 920167782, %v490
        %v506 = vshrl.u32 1326507024, %v491
        %v507 = vor.u32 %v505, %v506
        %vm508 = vcmp.lt.s32.totalorder %v489, 1
        %vm509 = vcmp.lt.s32.totalorder %v489, 2
        %vm510 = vcmp.lt.s32.totalorder %v489, 3
        %vm511 = vcmp.lt.s32.totalorder %v489, 4
        %v512 = vsel %vm508, %v492, %v495
        %v513 = vsel %vm511, %v501, 2102212464
        %v514 = vsel %vm510, %v498, %v513
        %v515 = vsel %vm509, %v512, %v514
        %v516 = vsel %vm508, %v495, %v498
        %v517 = vsel %vm511, %v504, 920167782
        %v518 = vsel %vm510, %v501, %v517
        %v519 = vsel %vm509, %v516, %v518
        %v520 = vsel %vm508, %v498, %v501
        %v521 = vsel %vm511, %v507, 1326507024
        %v522 = vsel %vm510, %v504, %v521
        %v523 = vsel %vm509, %v520, %v522
        %v524 = vshll.u32 %v484, 8
        %v525 = vmul.u32.u64.compose %v524, %v523
        %v526 = vextract.low.u32 %v525
        %v527 = vextract.high.u32 %v525
        %v528 = vmul.u32.u64.compose %v524, %v519
        %v529 = vextract.low.u32 %v528
        %v530 = vextract.high.u32 %v528
        %v531 = vmul.u32 %v524, %v515
        %v532 = vadd.s32 %v527, %v529
        %vm533 = vc.u32 %v527, %v529
        %v534 = vadd.s32 %v530, 1
        %v535 = vsel %vm533, %v534, %v530
        %v536 = vadd.s32 %v531, %v535
        %v537 = vadd.s32 %v536, 536870912
        %v538 = vshrl.u32 %v537, 30
        %v539 = vshll.u32 %v538, 30
        %v540 = vsub.s32 %v536, %v539
        %vm541 = vcmp.lt.s32.totalorder %v540, 0
        %v542 = vsub.s32 0, %v540
        %v543 = vsel %vm541, %v542, %v540
        %v544 = vclz %v543
        %v545 = vsub.s32 %v544, 2
        %vm546 = vcmp.gt.s32.totalorder 0, %v545
        %v547 = vsel %vm546, 0, %v545
        %v548 = vsub.s32 32, %v547
        %v549 = vshll.u32 %v540, %v547
        %v550 = vshrl.u32 %v532, %v548
        %v551 = vor.u32 %v549, %v550
        %v552 = vsub.s32 4294967266, %v547
        %v553 = vadd.s32 %v552, 127
        %v554 = vshll.u32 %v553, 23
        %v555 = vor.u32 4788187, %v554
        %v556 = vand.u32 2147483647, %v555
        %v558 = vcvt.s32.f32 %v551
        %v559 = vmul.f32 %v558, %v556
        %v560 = vxor.u32 %v559, 2147483648
        %v561 = vsel %vm478, %v560, %v559
        %v562 = vsub.s32 4, %v538
        %v563 = vsel %vm478, %v562, %v538
        %v564 = vsel %vm477, %v163, %v561
        %v565 = vsel %vm477, 0, %v563
        %v566 = vcosq.f32.pop %v564
        %v567 = vsinq.f32.pop %v564
        %vm568 = vweird.f32 %v163
        %v569 = vadd.s32 %v565, 3
        %v570 = vand.u32 %v569, 3
        %vm571 = vcmp.lt.s32.totalorder %v570, 2
        %vm572 = vcmp.eq.s32.totalorder %v570, 0
        %v573 = vxor.u32 %v567, 2147483648
        %v574 = vsel %vm572, %v566, %v573
        %vm575 = vcmp.eq.s32.totalorder %v570, 2
        %v576 = vxor.u32 %v566, 2147483648
        %v577 = vsel %vm575, %v576, %v567
        %v578 = vsel %vm571, %v574, %v577
        %v579 = vsel %vm568, nan, %v578
        %v580 = vand.u32 2147483647, %v160
        %vm581 = vcmp.le.f32.partialorder %v580, 0.7853982
        %vm582 = vcmp.lt.s32.totalorder %v160, 0
        %v583 = vand.u32 %v160, 2139095040
        %v584 = vshrl.u32 %v583, 23
        %v585 = vsub.s32 %v584, 127
        %v586 = vand.u32 2147483647, %v160
        %v587 = vand.u32 %v586, 8388607
        %v588 = vor.u32 %v587, 8388608
        %v589 = vsub.s32 0, %v588
        %v590 = vadd.s32 %v585, 1
        %vm591 = vcmp.gt.s32.totalorder %v590, 0
        %v592 = vsel %vm591, %v590, 0
        %v593 = vshrl.u32 %v592, 5
        %v594 = vand.u32 %v592, 31
        %v595 = vsub.s32 32, %v594
        %v596 = vshrl.u32 683565275, %v595
        %v597 = vshll.u32 683565275, %v594
        %v598 = vshrl.u32 2475754826, %v595
        %v599 = vor.u32 %v597, %v598
        %v600 = vshll.u32 2475754826, %v594
        %v601 = vshrl.u32 2131351028, %v595
        %v602 = vor.u32 %v600, %v601
        %v603 = vshll.u32 2131351028, %v594
        %v604 = vshrl.u32 2102212464, %v595
        %v605 = vor.u32 %v603, %v604
        %v606 = vshll.u32 2102212464, %v594
        %v607 = vshrl.u32 920167782, %v595
        %v608 = vor.u32 %v606, %v607
        %v609 = vshll.u32 920167782, %v594
        %v610 = vshrl.u32 1326507024, %v595
        %v611 = vor.u32 %v609, %v610
        %vm612 = vcmp.lt.s32.totalorder %v593, 1
        %vm613 = vcmp.lt.s32.totalorder %v593, 2
        %vm614 = vcmp.lt.s32.totalorder %v593, 3
        %vm615 = vcmp.lt.s32.totalorder %v593, 4
        %v616 = vsel %vm612, %v596, %v599
        %v617 = vsel %vm615, %v605, 2102212464
        %v618 = vsel %vm614, %v602, %v617
        %v619 = vsel %vm613, %v616, %v618
        %v620 = vsel %vm612, %v599, %v602
        %v621 = vsel %vm615, %v608, 920167782
        %v622 = vsel %vm614, %v605, %v621
        %v623 = vsel %vm613, %v620, %v622
        %v624 = vsel %vm612, %v602, %v605
        %v625 = vsel %vm615, %v611, 1326507024
        %v626 = vsel %vm614, %v608, %v625
        %v627 = vsel %vm613, %v624, %v626
        %v628 = vshll.u32 %v588, 8
        %v629 = vmul.u32.u64.compose %v628, %v627
        %v630 = vextract.low.u32 %v629
        %v631 = vextract.high.u32 %v629
        %v632 = vmul.u32.u64.compose %v628, %v623
        %v633 = vextract.low.u32 %v632
        %v634 = vextract.high.u32 %v632
        %v635 = vmul.u32 %v628, %v619
        %v636 = vadd.s32 %v631, %v633
        %vm637 = vc.u32 %v631, %v633
        %v638 = vadd.s32 %v634, 1
        %v639 = vsel %vm637, %v638, %v634
        %v640 = vadd.s32 %v635, %v639
        %v641 = vadd.s32 %v640, 536870912
        %v642 = vshrl.u32 %v641, 30
        %v643 = vshll.u32 %v642, 30
        %v644 = vsub.s32 %v640, %v643
        %vm645 = vcmp.lt.s32.totalorder %v644, 0
        %v646 = vsub.s32 0, %v644
        %v647 = vsel %vm645, %v646, %v644
        %v648 = vclz %v647
        %v649 = vsub.s32 %v648, 2
        %vm650 = vcmp.gt.s32.totalorder 0, %v649
        %v651 = vsel %vm650, 0, %v649
        %v652 = vsub.s32 32, %v651
        %v653 = vshll.u32 %v644, %v651
        %v654 = vshrl.u32 %v636, %v652
        %v655 = vor.u32 %v653, %v654
        %v656 = vsub.s32 4294967266, %v651
        %v657 = vadd.s32 %v656, 127
        %v658 = vshll.u32 %v657, 23
        %v659 = vor.u32 4788187, %v658
        %v660 = vand.u32 2147483647, %v659
        %v662 = vcvt.s32.f32 %v655
        %v663 = vmul.f32 %v662, %v660
        %v664 = vxor.u32 %v663, 2147483648
        %v665 = vsel %vm582, %v664, %v663
        %v666 = vsub.s32 4, %v642
        %v667 = vsel %vm582, %v666, %v642
        %v668 = vsel %vm581, %v160, %v665
        %v669 = vsel %vm581, 0, %v667
        %v670 = vcosq.f32.pop %v668
        %v671 = vsinq.f32.pop %v668
        %vm672 = vweird.f32 %v160
        %v673 = vand.u32 %v669, 3
        %vm674 = vcmp.lt.s32.totalorder %v673, 2
        %vm675 = vcmp.eq.s32.totalorder %v673, 0
        %v676 = vxor.u32 %v671, 2147483648
        %v677 = vsel %vm675, %v670, %v676
        %vm678 = vcmp.eq.s32.totalorder %v673, 2
        %v679 = vxor.u32 %v670, 2147483648
        %v680 = vsel %vm678, %v679, %v671
        %v681 = vsel %vm674, %v677, %v680
        %v682 = vsel %vm672, nan, %v681
        %v683 = vand.u32 2147483647, %v161
        %vm684 = vcmp.le.f32.partialorder %v683, 0.7853982
        %vm685 = vcmp.lt.s32.totalorder %v161, 0
        %v686 = vand.u32 %v161, 2139095040
        %v687 = vshrl.u32 %v686, 23
        %v688 = vsub.s32 %v687, 127
        %v689 = vand.u32 2147483647, %v161
        %v690 = vand.u32 %v689, 8388607
        %v691 = vor.u32 %v690, 8388608
        %v692 = vsub.s32 0, %v691
        %v693 = vadd.s32 %v688, 1
        %vm694 = vcmp.gt.s32.totalorder %v693, 0
        %v695 = vsel %vm694, %v693, 0
        %v696 = vshrl.u32 %v695, 5
        %v697 = vand.u32 %v695, 31
        %v698 = vsub.s32 32, %v697
        %v699 = vshrl.u32 683565275, %v698
        %v700 = vshll.u32 683565275, %v697
        %v701 = vshrl.u32 2475754826, %v698
        %v702 = vor.u32 %v700, %v701
        %v703 = vshll.u32 2475754826, %v697
        %v704 = vshrl.u32 2131351028, %v698
        %v705 = vor.u32 %v703, %v704
        %v706 = vshll.u32 2131351028, %v697
        %v707 = vshrl.u32 2102212464, %v698
        %v708 = vor.u32 %v706, %v707
        %v709 = vshll.u32 2102212464, %v697
        %v710 = vshrl.u32 920167782, %v698
        %v711 = vor.u32 %v709, %v710
        %v712 = vshll.u32 920167782, %v697
        %v713 = vshrl.u32 1326507024, %v698
        %v714 = vor.u32 %v712, %v713
        %vm715 = vcmp.lt.s32.totalorder %v696, 1
        %vm716 = vcmp.lt.s32.totalorder %v696, 2
        %vm717 = vcmp.lt.s32.totalorder %v696, 3
        %vm718 = vcmp.lt.s32.totalorder %v696, 4
        %v719 = vsel %vm715, %v699, %v702
        %v720 = vsel %vm718, %v708, 2102212464
        %v721 = vsel %vm717, %v705, %v720
        %v722 = vsel %vm716, %v719, %v721
        %v723 = vsel %vm715, %v702, %v705
        %v724 = vsel %vm718, %v711, 920167782
        %v725 = vsel %vm717, %v708, %v724
        %v726 = vsel %vm716, %v723, %v725
        %v727 = vsel %vm715, %v705, %v708
        %v728 = vsel %vm718, %v714, 1326507024
        %v729 = vsel %vm717, %v711, %v728
        %v730 = vsel %vm716, %v727, %v729
        %v731 = vshll.u32 %v691, 8
        %v732 = vmul.u32.u64.compose %v731, %v730
        %v733 = vextract.low.u32 %v732
        %v734 = vextract.high.u32 %v732
        %v735 = vmul.u32.u64.compose %v731, %v726
        %v736 = vextract.low.u32 %v735
        %v737 = vextract.high.u32 %v735
        %v738 = vmul.u32 %v731, %v722
        %v739 = vadd.s32 %v734, %v736
        %vm740 = vc.u32 %v734, %v736
        %v741 = vadd.s32 %v737, 1
        %v742 = vsel %vm740, %v741, %v737
        %v743 = vadd.s32 %v738, %v742
        %v744 = vadd.s32 %v743, 536870912
        %v745 = vshrl.u32 %v744, 30
        %v746 = vshll.u32 %v745, 30
        %v747 = vsub.s32 %v743, %v746
        %vm748 = vcmp.lt.s32.totalorder %v747, 0
        %v749 = vsub.s32 0, %v747
        %v750 = vsel %vm748, %v749, %v747
        %v751 = vclz %v750
        %v752 = vsub.s32 %v751, 2
        %vm753 = vcmp.gt.s32.totalorder 0, %v752
        %v754 = vsel %vm753, 0, %v752
        %v755 = vsub.s32 32, %v754
        %v756 = vshll.u32 %v747, %v754
        %v757 = vshrl.u32 %v739, %v755
        %v758 = vor.u32 %v756, %v757
        %v759 = vsub.s32 4294967266, %v754
        %v760 = vadd.s32 %v759, 127
        %v761 = vshll.u32 %v760, 23
        %v762 = vor.u32 4788187, %v761
        %v763 = vand.u32 2147483647, %v762
        %v765 = vcvt.s32.f32 %v758
        %v766 = vmul.f32 %v765, %v763
        %v767 = vxor.u32 %v766, 2147483648
        %v768 = vsel %vm685, %v767, %v766
        %v769 = vsub.s32 4, %v745
        %v770 = vsel %vm685, %v769, %v745
        %v771 = vsel %vm684, %v161, %v768
        %v772 = vsel %vm684, 0, %v770
        %v773 = vcosq.f32.pop %v771
        %v774 = vsinq.f32.pop %v771
        %vm775 = vweird.f32 %v161
        %v776 = vand.u32 %v772, 3
        %vm777 = vcmp.lt.s32.totalorder %v776, 2
        %vm778 = vcmp.eq.s32.totalorder %v776, 0
        %v779 = vxor.u32 %v774, 2147483648
        %v780 = vsel %vm778, %v773, %v779
        %vm781 = vcmp.eq.s32.totalorder %v776, 2
        %v782 = vxor.u32 %v773, 2147483648
        %v783 = vsel %vm781, %v782, %v774
        %v784 = vsel %vm777, %v780, %v783
        %v785 = vsel %vm775, nan, %v784
        %v786 = vand.u32 2147483647, %v162
        %vm787 = vcmp.le.f32.partialorder %v786, 0.7853982
        %vm788 = vcmp.lt.s32.totalorder %v162, 0
        %v789 = vand.u32 %v162, 2139095040
        %v790 = vshrl.u32 %v789, 23
        %v791 = vsub.s32 %v790, 127
        %v792 = vand.u32 2147483647, %v162
        %v793 = vand.u32 %v792, 8388607
        %v794 = vor.u32 %v793, 8388608
        %v795 = vsub.s32 0, %v794
        %v796 = vadd.s32 %v791, 1
        %vm797 = vcmp.gt.s32.totalorder %v796, 0
        %v798 = vsel %vm797, %v796, 0
        %v799 = vshrl.u32 %v798, 5
        %v800 = vand.u32 %v798, 31
        %v801 = vsub.s32 32, %v800
        %v802 = vshrl.u32 683565275, %v801
        %v803 = vshll.u32 683565275, %v800
        %v804 = vshrl.u32 2475754826, %v801
        %v805 = vor.u32 %v803, %v804
        %v806 = vshll.u32 2475754826, %v800
        %v807 = vshrl.u32 2131351028, %v801
        %v808 = vor.u32 %v806, %v807
        %v809 = vshll.u32 2131351028, %v800
        %v810 = vshrl.u32 2102212464, %v801
        %v811 = vor.u32 %v809, %v810
        %v812 = vshll.u32 2102212464, %v800
        %v813 = vshrl.u32 920167782, %v801
        %v814 = vor.u32 %v812, %v813
        %v815 = vshll.u32 920167782, %v800
        %v816 = vshrl.u32 1326507024, %v801
        %v817 = vor.u32 %v815, %v816
        %vm818 = vcmp.lt.s32.totalorder %v799, 1
        %vm819 = vcmp.lt.s32.totalorder %v799, 2
        %vm820 = vcmp.lt.s32.totalorder %v799, 3
        %vm821 = vcmp.lt.s32.totalorder %v799, 4
        %v822 = vsel %vm818, %v802, %v805
        %v823 = vsel %vm821, %v811, 2102212464
        %v824 = vsel %vm820, %v808, %v823
        %v825 = vsel %vm819, %v822, %v824
        %v826 = vsel %vm818, %v805, %v808
        %v827 = vsel %vm821, %v814, 920167782
        %v828 = vsel %vm820, %v811, %v827
        %v829 = vsel %vm819, %v826, %v828
        %v830 = vsel %vm818, %v808, %v811
        %v831 = vsel %vm821, %v817, 1326507024
        %v832 = vsel %vm820, %v814, %v831
        %v833 = vsel %vm819, %v830, %v832
        %v834 = vshll.u32 %v794, 8
        %v835 = vmul.u32.u64.compose %v834, %v833
        %v836 = vextract.low.u32 %v835
        %v837 = vextract.high.u32 %v835
        %v838 = vmul.u32.u64.compose %v834, %v829
        %v839 = vextract.low.u32 %v838
        %v840 = vextract.high.u32 %v838
        %v841 = vmul.u32 %v834, %v825
        %v842 = vadd.s32 %v837, %v839
        %vm843 = vc.u32 %v837, %v839
        %v844 = vadd.s32 %v840, 1
        %v845 = vsel %vm843, %v844, %v840
        %v846 = vadd.s32 %v841, %v845
        %v847 = vadd.s32 %v846, 536870912
        %v848 = vshrl.u32 %v847, 30
        %v849 = vshll.u32 %v848, 30
        %v850 = vsub.s32 %v846, %v849
        %vm851 = vcmp.lt.s32.totalorder %v850, 0
        %v852 = vsub.s32 0, %v850
        %v853 = vsel %vm851, %v852, %v850
        %v854 = vclz %v853
        %v855 = vsub.s32 %v854, 2
        %vm856 = vcmp.gt.s32.totalorder 0, %v855
        %v857 = vsel %vm856, 0, %v855
        %v858 = vsub.s32 32, %v857
        %v859 = vshll.u32 %v850, %v857
        %v860 = vshrl.u32 %v842, %v858
        %v861 = vor.u32 %v859, %v860
        %v862 = vsub.s32 4294967266, %v857
        %v863 = vadd.s32 %v862, 127
        %v864 = vshll.u32 %v863, 23
        %v865 = vor.u32 4788187, %v864
        %v866 = vand.u32 2147483647, %v865
        %v868 = vcvt.s32.f32 %v861
        %v869 = vmul.f32 %v868, %v866
        %v870 = vxor.u32 %v869, 2147483648
        %v871 = vsel %vm788, %v870, %v869
        %v872 = vsub.s32 4, %v848
        %v873 = vsel %vm788, %v872, %v848
        %v874 = vsel %vm787, %v162, %v871
        %v875 = vsel %vm787, 0, %v873
        %v876 = vcosq.f32.pop %v874
        %v877 = vsinq.f32.pop %v874
        %vm878 = vweird.f32 %v162
        %v879 = vand.u32 %v875, 3
        %vm880 = vcmp.lt.s32.totalorder %v879, 2
        %vm881 = vcmp.eq.s32.totalorder %v879, 0
        %v882 = vxor.u32 %v877, 2147483648
        %v883 = vsel %vm881, %v876, %v882
        %vm884 = vcmp.eq.s32.totalorder %v879, 2
        %v885 = vxor.u32 %v876, 2147483648
        %v886 = vsel %vm884, %v885, %v877
        %v887 = vsel %vm880, %v883, %v886
        %v888 = vsel %vm878, nan, %v887
        %v889 = vand.u32 2147483647, %v163
        %vm890 = vcmp.le.f32.partialorder %v889, 0.7853982
        %vm891 = vcmp.lt.s32.totalorder %v163, 0
        %v892 = vand.u32 %v163, 2139095040
        %v893 = vshrl.u32 %v892, 23
        %v894 = vsub.s32 %v893, 127
        %v895 = vand.u32 2147483647, %v163
        %v896 = vand.u32 %v895, 8388607
        %v897 = vor.u32 %v896, 8388608
        %v898 = vsub.s32 0, %v897
        %v899 = vadd.s32 %v894, 1
        %vm900 = vcmp.gt.s32.totalorder %v899, 0
        %v901 = vsel %vm900, %v899, 0
        %v902 = vshrl.u32 %v901, 5
        %v903 = vand.u32 %v901, 31
        %v904 = vsub.s32 32, %v903
        %v905 = vshrl.u32 683565275, %v904
        %v906 = vshll.u32 683565275, %v903
        %v907 = vshrl.u32 2475754826, %v904
        %v908 = vor.u32 %v906, %v907
        %v909 = vshll.u32 2475754826, %v903
        %v910 = vshrl.u32 2131351028, %v904
        %v911 = vor.u32 %v909, %v910
        %v912 = vshll.u32 2131351028, %v903
        %v913 = vshrl.u32 2102212464, %v904
        %v914 = vor.u32 %v912, %v913
        %v915 = vshll.u32 2102212464, %v903
        %v916 = vshrl.u32 920167782, %v904
        %v917 = vor.u32 %v915, %v916
        %v918 = vshll.u32 920167782, %v903
        %v919 = vshrl.u32 1326507024, %v904
        %v920 = vor.u32 %v918, %v919
        %vm921 = vcmp.lt.s32.totalorder %v902, 1
        %vm922 = vcmp.lt.s32.totalorder %v902, 2
        %vm923 = vcmp.lt.s32.totalorder %v902, 3
        %vm924 = vcmp.lt.s32.totalorder %v902, 4
        %v925 = vsel %vm921, %v905, %v908
        %v926 = vsel %vm924, %v914, 2102212464
        %v927 = vsel %vm923, %v911, %v926
        %v928 = vsel %vm922, %v925, %v927
        %v929 = vsel %vm921, %v908, %v911
        %v930 = vsel %vm924, %v917, 920167782
        %v931 = vsel %vm923, %v914, %v930
        %v932 = vsel %vm922, %v929, %v931
        %v933 = vsel %vm921, %v911, %v914
        %v934 = vsel %vm924, %v920, 1326507024
        %v935 = vsel %vm923, %v917, %v934
        %v936 = vsel %vm922, %v933, %v935
        %v937 = vshll.u32 %v897, 8
        %v938 = vmul.u32.u64.compose %v937, %v936
        %v939 = vextract.low.u32 %v938
        %v940 = vextract.high.u32 %v938
        %v941 = vmul.u32.u64.compose %v937, %v932
        %v942 = vextract.low.u32 %v941
        %v943 = vextract.high.u32 %v941
        %v944 = vmul.u32 %v937, %v928
        %v945 = vadd.s32 %v940, %v942
        %vm946 = vc.u32 %v940, %v942
        %v947 = vadd.s32 %v943, 1
        %v948 = vsel %vm946, %v947, %v943
        %v949 = vadd.s32 %v944, %v948
        %v950 = vadd.s32 %v949, 536870912
        %v951 = vshrl.u32 %v950, 30
        %v952 = vshll.u32 %v951, 30
        %v953 = vsub.s32 %v949, %v952
        %vm954 = vcmp.lt.s32.totalorder %v953, 0
        %v955 = vsub.s32 0, %v953
        %v956 = vsel %vm954, %v955, %v953
        %v957 = vclz %v956
        %v958 = vsub.s32 %v957, 2
        %vm959 = vcmp.gt.s32.totalorder 0, %v958
        %v960 = vsel %vm959, 0, %v958
        %v961 = vsub.s32 32, %v960
        %v962 = vshll.u32 %v953, %v960
        %v963 = vshrl.u32 %v945, %v961
        %v964 = vor.u32 %v962, %v963
        %v965 = vsub.s32 4294967266, %v960
        %v966 = vadd.s32 %v965, 127
        %v967 = vshll.u32 %v966, 23
        %v968 = vor.u32 4788187, %v967
        %v969 = vand.u32 2147483647, %v968
        %v971 = vcvt.s32.f32 %v964
        %v972 = vmul.f32 %v971, %v969
        %v973 = vxor.u32 %v972, 2147483648
        %v974 = vsel %vm891, %v973, %v972
        %v975 = vsub.s32 4, %v951
        %v976 = vsel %vm891, %v975, %v951
        %v977 = vsel %vm890, %v163, %v974
        %v978 = vsel %vm890, 0, %v976
        %v979 = vcosq.f32.pop %v977
        %v980 = vsinq.f32.pop %v977
        %vm981 = vweird.f32 %v163
        %v982 = vand.u32 %v978, 3
        %vm983 = vcmp.lt.s32.totalorder %v982, 2
        %vm984 = vcmp.eq.s32.totalorder %v982, 0
        %v985 = vxor.u32 %v980, 2147483648
        %v986 = vsel %vm984, %v979, %v985
        %vm987 = vcmp.eq.s32.totalorder %v982, 2
        %v988 = vxor.u32 %v979, 2147483648
        %v989 = vsel %vm987, %v988, %v980
        %v990 = vsel %vm983, %v986, %v989
        %v991 = vsel %vm981, nan, %v990
        %s992 = scalar_lea.vmem %s151, 8 [#allocation5]
        %993 = vst [vmem:[%s992] sm:$0x3] %v267
        %s994 = scalar_lea.vmem %s151, 24 [#allocation5]
        %995 = vst [vmem:[%s994] sm:$0x3] %v682
        %s996 = scalar_lea.vmem %s151, 12 [#allocation5]
        %997 = vst [vmem:[%s996] sm:$0x3] %v371
        %s998 = scalar_lea.vmem %s151, 28 [#allocation5]
        %999 = vst [vmem:[%s998] sm:$0x3] %v785
        %s1000 = scalar_lea.vmem %s151, 16 [#allocation5]
        %1001 = vst [vmem:[%s1000] sm:$0x3] %v475
        %s1002 = scalar_lea.vmem %s151, 32 [#allocation5]
        %1003 = vst [vmem:[%s1002] sm:$0x3] %v888
        %s1004 = scalar_lea.vmem %s151, 20 [#allocation5]
        %1005 = vst [vmem:[%s1004] sm:$0x3] %v579
        %s1006 = scalar_lea.vmem %s151, 36 [#allocation5]
        %1007 = vst [vmem:[%s1006] sm:$0x3] %v991
        %v1008 = vmul.f32 %v152, 804.24774
        %v1009 = vmul.f32 %v153, 804.24774
        %v1010 = vmul.f32 %v154, 804.24774
        %v1011 = vmul.f32 %v155, 804.24774
        %v1012 = vand.u32 2147483647, %v1008
        %vm1013 = vcmp.le.f32.partialorder %v1012, 0.7853982
        %vm1014 = vcmp.lt.s32.totalorder %v1008, 0
        %v1015 = vand.u32 %v1008, 2139095040
        %v1016 = vshrl.u32 %v1015, 23
        %v1017 = vsub.s32 %v1016, 127
        %v1018 = vand.u32 2147483647, %v1008
        %v1019 = vand.u32 %v1018, 8388607
        %v1020 = vor.u32 %v1019, 8388608
        %v1021 = vsub.s32 0, %v1020
        %v1022 = vadd.s32 %v1017, 1
        %vm1023 = vcmp.gt.s32.totalorder %v1022, 0
        %v1024 = vsel %vm1023, %v1022, 0
        %v1025 = vshrl.u32 %v1024, 5
        %v1026 = vand.u32 %v1024, 31
        %v1027 = vsub.s32 32, %v1026
        %v1028 = vshrl.u32 683565275, %v1027
        %v1029 = vshll.u32 683565275, %v1026
        %v1030 = vshrl.u32 2475754826, %v1027
        %v1031 = vor.u32 %v1029, %v1030
        %v1032 = vshll.u32 2475754826, %v1026
        %v1033 = vshrl.u32 2131351028, %v1027
        %v1034 = vor.u32 %v1032, %v1033
        %v1035 = vshll.u32 2131351028, %v1026
        %v1036 = vshrl.u32 2102212464, %v1027
        %v1037 = vor.u32 %v1035, %v1036
        %v1038 = vshll.u32 2102212464, %v1026
        %v1039 = vshrl.u32 920167782, %v1027
        %v1040 = vor.u32 %v1038, %v1039
        %v1041 = vshll.u32 920167782, %v1026
        %v1042 = vshrl.u32 1326507024, %v1027
        %v1043 = vor.u32 %v1041, %v1042
        %vm1044 = vcmp.lt.s32.totalorder %v1025, 1
        %vm1045 = vcmp.lt.s32.totalorder %v1025, 2
        %vm1046 = vcmp.lt.s32.totalorder %v1025, 3
        %vm1047 = vcmp.lt.s32.totalorder %v1025, 4
        %v1048 = vsel %vm1044, %v1028, %v1031
        %v1049 = vsel %vm1047, %v1037, 2102212464
        %v1050 = vsel %vm1046, %v1034, %v1049
        %v1051 = vsel %vm1045, %v1048, %v1050
        %v1052 = vsel %vm1044, %v1031, %v1034
        %v1053 = vsel %vm1047, %v1040, 920167782
        %v1054 = vsel %vm1046, %v1037, %v1053
        %v1055 = vsel %vm1045, %v1052, %v1054
        %v1056 = vsel %vm1044, %v1034, %v1037
        %v1057 = vsel %vm1047, %v1043, 1326507024
        %v1058 = vsel %vm1046, %v1040, %v1057
        %v1059 = vsel %vm1045, %v1056, %v1058
        %v1060 = vshll.u32 %v1020, 8
        %v1061 = vmul.u32.u64.compose %v1060, %v1059
        %v1062 = vextract.low.u32 %v1061
        %v1063 = vextract.high.u32 %v1061
        %v1064 = vmul.u32.u64.compose %v1060, %v1055
        %v1065 = vextract.low.u32 %v1064
        %v1066 = vextract.high.u32 %v1064
        %v1067 = vmul.u32 %v1060, %v1051
        %v1068 = vadd.s32 %v1063, %v1065
        %vm1069 = vc.u32 %v1063, %v1065
        %v1070 = vadd.s32 %v1066, 1
        %v1071 = vsel %vm1069, %v1070, %v1066
        %v1072 = vadd.s32 %v1067, %v1071
        %v1073 = vadd.s32 %v1072, 536870912
        %v1074 = vshrl.u32 %v1073, 30
        %v1075 = vshll.u32 %v1074, 30
        %v1076 = vsub.s32 %v1072, %v1075
        %vm1077 = vcmp.lt.s32.totalorder %v1076, 0
        %v1078 = vsub.s32 0, %v1076
        %v1079 = vsel %vm1077, %v1078, %v1076
        %v1080 = vclz %v1079
        %v1081 = vsub.s32 %v1080, 2
        %vm1082 = vcmp.gt.s32.totalorder 0, %v1081
        %v1083 = vsel %vm1082, 0, %v1081
        %v1084 = vsub.s32 32, %v1083
        %v1085 = vshll.u32 %v1076, %v1083
        %v1086 = vshrl.u32 %v1068, %v1084
        %v1087 = vor.u32 %v1085, %v1086
        %v1088 = vsub.s32 4294967266, %v1083
        %v1089 = vadd.s32 %v1088, 127
        %v1090 = vshll.u32 %v1089, 23
        %v1091 = vor.u32 4788187, %v1090
        %v1092 = vand.u32 2147483647, %v1091
        %v1094 = vcvt.s32.f32 %v1087
        %v1095 = vmul.f32 %v1094, %v1092
        %v1096 = vxor.u32 %v1095, 2147483648
        %v1097 = vsel %vm1014, %v1096, %v1095
        %v1098 = vsub.s32 4, %v1074
        %v1099 = vsel %vm1014, %v1098, %v1074
        %v1100 = vsel %vm1013, %v1008, %v1097
        %v1101 = vsel %vm1013, 0, %v1099
        %v1102 = vcosq.f32.pop %v1100
        %v1103 = vsinq.f32.pop %v1100
        %vm1104 = vweird.f32 %v1008
        %v1105 = vadd.s32 %v1101, 3
        %v1106 = vand.u32 %v1105, 3
        %vm1107 = vcmp.lt.s32.totalorder %v1106, 2
        %vm1108 = vcmp.eq.s32.totalorder %v1106, 0
        %v1109 = vxor.u32 %v1103, 2147483648
        %v1110 = vsel %vm1108, %v1102, %v1109
        %vm1111 = vcmp.eq.s32.totalorder %v1106, 2
        %v1112 = vxor.u32 %v1102, 2147483648
        %v1113 = vsel %vm1111, %v1112, %v1103
        %v1114 = vsel %vm1107, %v1110, %v1113
        %v1115 = vsel %vm1104, nan, %v1114
        %v1116 = vand.u32 2147483647, %v1009
        %vm1117 = vcmp.le.f32.partialorder %v1116, 0.7853982
        %vm1118 = vcmp.lt.s32.totalorder %v1009, 0
        %v1119 = vand.u32 %v1009, 2139095040
        %v1120 = vshrl.u32 %v1119, 23
        %v1121 = vsub.s32 %v1120, 127
        %v1122 = vand.u32 2147483647, %v1009
        %v1123 = vand.u32 %v1122, 8388607
        %v1124 = vor.u32 %v1123, 8388608
        %v1125 = vsub.s32 0, %v1124
        %v1126 = vadd.s32 %v1121, 1
        %vm1127 = vcmp.gt.s32.totalorder %v1126, 0
        %v1128 = vsel %vm1127, %v1126, 0
        %v1129 = vshrl.u32 %v1128, 5
        %v1130 = vand.u32 %v1128, 31
        %v1131 = vsub.s32 32, %v1130
        %v1132 = vshrl.u32 683565275, %v1131
        %v1133 = vshll.u32 683565275, %v1130
        %v1134 = vshrl.u32 2475754826, %v1131
        %v1135 = vor.u32 %v1133, %v1134
        %v1136 = vshll.u32 2475754826, %v1130
        %v1137 = vshrl.u32 2131351028, %v1131
        %v1138 = vor.u32 %v1136, %v1137
        %v1139 = vshll.u32 2131351028, %v1130
        %v1140 = vshrl.u32 2102212464, %v1131
        %v1141 = vor.u32 %v1139, %v1140
        %v1142 = vshll.u32 2102212464, %v1130
        %v1143 = vshrl.u32 920167782, %v1131
        %v1144 = vor.u32 %v1142, %v1143
        %v1145 = vshll.u32 920167782, %v1130
        %v1146 = vshrl.u32 1326507024, %v1131
        %v1147 = vor.u32 %v1145, %v1146
        %vm1148 = vcmp.lt.s32.totalorder %v1129, 1
        %vm1149 = vcmp.lt.s32.totalorder %v1129, 2
        %vm1150 = vcmp.lt.s32.totalorder %v1129, 3
        %vm1151 = vcmp.lt.s32.totalorder %v1129, 4
        %v1152 = vsel %vm1148, %v1132, %v1135
        %v1153 = vsel %vm1151, %v1141, 2102212464
        %v1154 = vsel %vm1150, %v1138, %v1153
        %v1155 = vsel %vm1149, %v1152, %v1154
        %v1156 = vsel %vm1148, %v1135, %v1138
        %v1157 = vsel %vm1151, %v1144, 920167782
        %v1158 = vsel %vm1150, %v1141, %v1157
        %v1159 = vsel %vm1149, %v1156, %v1158
        %v1160 = vsel %vm1148, %v1138, %v1141
        %v1161 = vsel %vm1151, %v1147, 1326507024
        %v1162 = vsel %vm1150, %v1144, %v1161
        %v1163 = vsel %vm1149, %v1160, %v1162
        %v1164 = vshll.u32 %v1124, 8
        %v1165 = vmul.u32.u64.compose %v1164, %v1163
        %v1166 = vextract.low.u32 %v1165
        %v1167 = vextract.high.u32 %v1165
        %v1168 = vmul.u32.u64.compose %v1164, %v1159
        %v1169 = vextract.low.u32 %v1168
        %v1170 = vextract.high.u32 %v1168
        %v1171 = vmul.u32 %v1164, %v1155
        %v1172 = vadd.s32 %v1167, %v1169
        %vm1173 = vc.u32 %v1167, %v1169
        %v1174 = vadd.s32 %v1170, 1
        %v1175 = vsel %vm1173, %v1174, %v1170
        %v1176 = vadd.s32 %v1171, %v1175
        %v1177 = vadd.s32 %v1176, 536870912
        %v1178 = vshrl.u32 %v1177, 30
        %v1179 = vshll.u32 %v1178, 30
        %v1180 = vsub.s32 %v1176, %v1179
        %vm1181 = vcmp.lt.s32.totalorder %v1180, 0
        %v1182 = vsub.s32 0, %v1180
        %v1183 = vsel %vm1181, %v1182, %v1180
        %v1184 = vclz %v1183
        %v1185 = vsub.s32 %v1184, 2
        %vm1186 = vcmp.gt.s32.totalorder 0, %v1185
        %v1187 = vsel %vm1186, 0, %v1185
        %v1188 = vsub.s32 32, %v1187
        %v1189 = vshll.u32 %v1180, %v1187
        %v1190 = vshrl.u32 %v1172, %v1188
        %v1191 = vor.u32 %v1189, %v1190
        %v1192 = vsub.s32 4294967266, %v1187
        %v1193 = vadd.s32 %v1192, 127
        %v1194 = vshll.u32 %v1193, 23
        %v1195 = vor.u32 4788187, %v1194
        %v1196 = vand.u32 2147483647, %v1195
        %v1198 = vcvt.s32.f32 %v1191
        %v1199 = vmul.f32 %v1198, %v1196
        %v1200 = vxor.u32 %v1199, 2147483648
        %v1201 = vsel %vm1118, %v1200, %v1199
        %v1202 = vsub.s32 4, %v1178
        %v1203 = vsel %vm1118, %v1202, %v1178
        %v1204 = vsel %vm1117, %v1009, %v1201
        %v1205 = vsel %vm1117, 0, %v1203
        %v1206 = vcosq.f32.pop %v1204
        %v1207 = vsinq.f32.pop %v1204
        %vm1208 = vweird.f32 %v1009
        %v1209 = vadd.s32 %v1205, 3
        %v1210 = vand.u32 %v1209, 3
        %vm1211 = vcmp.lt.s32.totalorder %v1210, 2
        %vm1212 = vcmp.eq.s32.totalorder %v1210, 0
        %v1213 = vxor.u32 %v1207, 2147483648
        %v1214 = vsel %vm1212, %v1206, %v1213
        %vm1215 = vcmp.eq.s32.totalorder %v1210, 2
        %v1216 = vxor.u32 %v1206, 2147483648
        %v1217 = vsel %vm1215, %v1216, %v1207
        %v1218 = vsel %vm1211, %v1214, %v1217
        %v1219 = vsel %vm1208, nan, %v1218
        %v1220 = vand.u32 2147483647, %v1010
        %vm1221 = vcmp.le.f32.partialorder %v1220, 0.7853982
        %vm1222 = vcmp.lt.s32.totalorder %v1010, 0
        %v1223 = vand.u32 %v1010, 2139095040
        %v1224 = vshrl.u32 %v1223, 23
        %v1225 = vsub.s32 %v1224, 127
        %v1226 = vand.u32 2147483647, %v1010
        %v1227 = vand.u32 %v1226, 8388607
        %v1228 = vor.u32 %v1227, 8388608
        %v1229 = vsub.s32 0, %v1228
        %v1230 = vadd.s32 %v1225, 1
        %vm1231 = vcmp.gt.s32.totalorder %v1230, 0
        %v1232 = vsel %vm1231, %v1230, 0
        %v1233 = vshrl.u32 %v1232, 5
        %v1234 = vand.u32 %v1232, 31
        %v1235 = vsub.s32 32, %v1234
        %v1236 = vshrl.u32 683565275, %v1235
        %v1237 = vshll.u32 683565275, %v1234
        %v1238 = vshrl.u32 2475754826, %v1235
        %v1239 = vor.u32 %v1237, %v1238
        %v1240 = vshll.u32 2475754826, %v1234
        %v1241 = vshrl.u32 2131351028, %v1235
        %v1242 = vor.u32 %v1240, %v1241
        %v1243 = vshll.u32 2131351028, %v1234
        %v1244 = vshrl.u32 2102212464, %v1235
        %v1245 = vor.u32 %v1243, %v1244
        %v1246 = vshll.u32 2102212464, %v1234
        %v1247 = vshrl.u32 920167782, %v1235
        %v1248 = vor.u32 %v1246, %v1247
        %v1249 = vshll.u32 920167782, %v1234
        %v1250 = vshrl.u32 1326507024, %v1235
        %v1251 = vor.u32 %v1249, %v1250
        %vm1252 = vcmp.lt.s32.totalorder %v1233, 1
        %vm1253 = vcmp.lt.s32.totalorder %v1233, 2
        %vm1254 = vcmp.lt.s32.totalorder %v1233, 3
        %vm1255 = vcmp.lt.s32.totalorder %v1233, 4
        %v1256 = vsel %vm1252, %v1236, %v1239
        %v1257 = vsel %vm1255, %v1245, 2102212464
        %v1258 = vsel %vm1254, %v1242, %v1257
        %v1259 = vsel %vm1253, %v1256, %v1258
        %v1260 = vsel %vm1252, %v1239, %v1242
        %v1261 = vsel %vm1255, %v1248, 920167782
        %v1262 = vsel %vm1254, %v1245, %v1261
        %v1263 = vsel %vm1253, %v1260, %v1262
        %v1264 = vsel %vm1252, %v1242, %v1245
        %v1265 = vsel %vm1255, %v1251, 1326507024
        %v1266 = vsel %vm1254, %v1248, %v1265
        %v1267 = vsel %vm1253, %v1264, %v1266
        %v1268 = vshll.u32 %v1228, 8
        %v1269 = vmul.u32.u64.compose %v1268, %v1267
        %v1270 = vextract.low.u32 %v1269
        %v1271 = vextract.high.u32 %v1269
        %v1272 = vmul.u32.u64.compose %v1268, %v1263
        %v1273 = vextract.low.u32 %v1272
        %v1274 = vextract.high.u32 %v1272
        %v1275 = vmul.u32 %v1268, %v1259
        %v1276 = vadd.s32 %v1271, %v1273
        %vm1277 = vc.u32 %v1271, %v1273
        %v1278 = vadd.s32 %v1274, 1
        %v1279 = vsel %vm1277, %v1278, %v1274
        %v1280 = vadd.s32 %v1275, %v1279
        %v1281 = vadd.s32 %v1280, 536870912
        %v1282 = vshrl.u32 %v1281, 30
        %v1283 = vshll.u32 %v1282, 30
        %v1284 = vsub.s32 %v1280, %v1283
        %vm1285 = vcmp.lt.s32.totalorder %v1284, 0
        %v1286 = vsub.s32 0, %v1284
        %v1287 = vsel %vm1285, %v1286, %v1284
        %v1288 = vclz %v1287
        %v1289 = vsub.s32 %v1288, 2
        %vm1290 = vcmp.gt.s32.totalorder 0, %v1289
        %v1291 = vsel %vm1290, 0, %v1289
        %v1292 = vsub.s32 32, %v1291
        %v1293 = vshll.u32 %v1284, %v1291
        %v1294 = vshrl.u32 %v1276, %v1292
        %v1295 = vor.u32 %v1293, %v1294
        %v1296 = vsub.s32 4294967266, %v1291
        %v1297 = vadd.s32 %v1296, 127
        %v1298 = vshll.u32 %v1297, 23
        %v1299 = vor.u32 4788187, %v1298
        %v1300 = vand.u32 2147483647, %v1299
        %v1302 = vcvt.s32.f32 %v1295
        %v1303 = vmul.f32 %v1302, %v1300
        %v1304 = vxor.u32 %v1303, 2147483648
        %v1305 = vsel %vm1222, %v1304, %v1303
        %v1306 = vsub.s32 4, %v1282
        %v1307 = vsel %vm1222, %v1306, %v1282
        %v1308 = vsel %vm1221, %v1010, %v1305
        %v1309 = vsel %vm1221, 0, %v1307
        %v1310 = vcosq.f32.pop %v1308
        %v1311 = vsinq.f32.pop %v1308
        %vm1312 = vweird.f32 %v1010
        %v1313 = vadd.s32 %v1309, 3
        %v1314 = vand.u32 %v1313, 3
        %vm1315 = vcmp.lt.s32.totalorder %v1314, 2
        %vm1316 = vcmp.eq.s32.totalorder %v1314, 0
        %v1317 = vxor.u32 %v1311, 2147483648
        %v1318 = vsel %vm1316, %v1310, %v1317
        %vm1319 = vcmp.eq.s32.totalorder %v1314, 2
        %v1320 = vxor.u32 %v1310, 2147483648
        %v1321 = vsel %vm1319, %v1320, %v1311
        %v1322 = vsel %vm1315, %v1318, %v1321
        %v1323 = vsel %vm1312, nan, %v1322
        %v1324 = vand.u32 2147483647, %v1011
        %vm1325 = vcmp.le.f32.partialorder %v1324, 0.7853982
        %vm1326 = vcmp.lt.s32.totalorder %v1011, 0
        %v1327 = vand.u32 %v1011, 2139095040
        %v1328 = vshrl.u32 %v1327, 23
        %v1329 = vsub.s32 %v1328, 127
        %v1330 = vand.u32 2147483647, %v1011
        %v1331 = vand.u32 %v1330, 8388607
        %v1332 = vor.u32 %v1331, 8388608
        %v1333 = vsub.s32 0, %v1332
        %v1334 = vadd.s32 %v1329, 1
        %vm1335 = vcmp.gt.s32.totalorder %v1334, 0
        %v1336 = vsel %vm1335, %v1334, 0
        %v1337 = vshrl.u32 %v1336, 5
        %v1338 = vand.u32 %v1336, 31
        %v1339 = vsub.s32 32, %v1338
        %v1340 = vshrl.u32 683565275, %v1339
        %v1341 = vshll.u32 683565275, %v1338
        %v1342 = vshrl.u32 2475754826, %v1339
        %v1343 = vor.u32 %v1341, %v1342
        %v1344 = vshll.u32 2475754826, %v1338
        %v1345 = vshrl.u32 2131351028, %v1339
        %v1346 = vor.u32 %v1344, %v1345
        %v1347 = vshll.u32 2131351028, %v1338
        %v1348 = vshrl.u32 2102212464, %v1339
        %v1349 = vor.u32 %v1347, %v1348
        %v1350 = vshll.u32 2102212464, %v1338
        %v1351 = vshrl.u32 920167782, %v1339
        %v1352 = vor.u32 %v1350, %v1351
        %v1353 = vshll.u32 920167782, %v1338
        %v1354 = vshrl.u32 1326507024, %v1339
        %v1355 = vor.u32 %v1353, %v1354
        %vm1356 = vcmp.lt.s32.totalorder %v1337, 1
        %vm1357 = vcmp.lt.s32.totalorder %v1337, 2
        %vm1358 = vcmp.lt.s32.totalorder %v1337, 3
        %vm1359 = vcmp.lt.s32.totalorder %v1337, 4
        %v1360 = vsel %vm1356, %v1340, %v1343
        %v1361 = vsel %vm1359, %v1349, 2102212464
        %v1362 = vsel %vm1358, %v1346, %v1361
        %v1363 = vsel %vm1357, %v1360, %v1362
        %v1364 = vsel %vm1356, %v1343, %v1346
        %v1365 = vsel %vm1359, %v1352, 920167782
        %v1366 = vsel %vm1358, %v1349, %v1365
        %v1367 = vsel %vm1357, %v1364, %v1366
        %v1368 = vsel %vm1356, %v1346, %v1349
        %v1369 = vsel %vm1359, %v1355, 1326507024
        %v1370 = vsel %vm1358, %v1352, %v1369
        %v1371 = vsel %vm1357, %v1368, %v1370
        %v1372 = vshll.u32 %v1332, 8
        %v1373 = vmul.u32.u64.compose %v1372, %v1371
        %v1374 = vextract.low.u32 %v1373
        %v1375 = vextract.high.u32 %v1373
        %v1376 = vmul.u32.u64.compose %v1372, %v1367
        %v1377 = vextract.low.u32 %v1376
        %v1378 = vextract.high.u32 %v1376
        %v1379 = vmul.u32 %v1372, %v1363
        %v1380 = vadd.s32 %v1375, %v1377
        %vm1381 = vc.u32 %v1375, %v1377
        %v1382 = vadd.s32 %v1378, 1
        %v1383 = vsel %vm1381, %v1382, %v1378
        %v1384 = vadd.s32 %v1379, %v1383
        %v1385 = vadd.s32 %v1384, 536870912
        %v1386 = vshrl.u32 %v1385, 30
        %v1387 = vshll.u32 %v1386, 30
        %v1388 = vsub.s32 %v1384, %v1387
        %vm1389 = vcmp.lt.s32.totalorder %v1388, 0
        %v1390 = vsub.s32 0, %v1388
        %v1391 = vsel %vm1389, %v1390, %v1388
        %v1392 = vclz %v1391
        %v1393 = vsub.s32 %v1392, 2
        %vm1394 = vcmp.gt.s32.totalorder 0, %v1393
        %v1395 = vsel %vm1394, 0, %v1393
        %v1396 = vsub.s32 32, %v1395
        %v1397 = vshll.u32 %v1388, %v1395
        %v1398 = vshrl.u32 %v1380, %v1396
        %v1399 = vor.u32 %v1397, %v1398
        %v1400 = vsub.s32 4294967266, %v1395
        %v1401 = vadd.s32 %v1400, 127
        %v1402 = vshll.u32 %v1401, 23
        %v1403 = vor.u32 4788187, %v1402
        %v1404 = vand.u32 2147483647, %v1403
        %v1406 = vcvt.s32.f32 %v1399
        %v1407 = vmul.f32 %v1406, %v1404
        %v1408 = vxor.u32 %v1407, 2147483648
        %v1409 = vsel %vm1326, %v1408, %v1407
        %v1410 = vsub.s32 4, %v1386
        %v1411 = vsel %vm1326, %v1410, %v1386
        %v1412 = vsel %vm1325, %v1011, %v1409
        %v1413 = vsel %vm1325, 0, %v1411
        %v1414 = vcosq.f32.pop %v1412
        %v1415 = vsinq.f32.pop %v1412
        %vm1416 = vweird.f32 %v1011
        %v1417 = vadd.s32 %v1413, 3
        %v1418 = vand.u32 %v1417, 3
        %vm1419 = vcmp.lt.s32.totalorder %v1418, 2
        %vm1420 = vcmp.eq.s32.totalorder %v1418, 0
        %v1421 = vxor.u32 %v1415, 2147483648
        %v1422 = vsel %vm1420, %v1414, %v1421
        %vm1423 = vcmp.eq.s32.totalorder %v1418, 2
        %v1424 = vxor.u32 %v1414, 2147483648
        %v1425 = vsel %vm1423, %v1424, %v1415
        %v1426 = vsel %vm1419, %v1422, %v1425
        %v1427 = vsel %vm1416, nan, %v1426
        %v1428 = vand.u32 2147483647, %v1008
        %vm1429 = vcmp.le.f32.partialorder %v1428, 0.7853982
        %vm1430 = vcmp.lt.s32.totalorder %v1008, 0
        %v1431 = vand.u32 %v1008, 2139095040
        %v1432 = vshrl.u32 %v1431, 23
        %v1433 = vsub.s32 %v1432, 127
        %v1434 = vand.u32 2147483647, %v1008
        %v1435 = vand.u32 %v1434, 8388607
        %v1436 = vor.u32 %v1435, 8388608
        %v1437 = vsub.s32 0, %v1436
        %v1438 = vadd.s32 %v1433, 1
        %vm1439 = vcmp.gt.s32.totalorder %v1438, 0
        %v1440 = vsel %vm1439, %v1438, 0
        %v1441 = vshrl.u32 %v1440, 5
        %v1442 = vand.u32 %v1440, 31
        %v1443 = vsub.s32 32, %v1442
        %v1444 = vshrl.u32 683565275, %v1443
        %v1445 = vshll.u32 683565275, %v1442
        %v1446 = vshrl.u32 2475754826, %v1443
        %v1447 = vor.u32 %v1445, %v1446
        %v1448 = vshll.u32 2475754826, %v1442
        %v1449 = vshrl.u32 2131351028, %v1443
        %v1450 = vor.u32 %v1448, %v1449
        %v1451 = vshll.u32 2131351028, %v1442
        %v1452 = vshrl.u32 2102212464, %v1443
        %v1453 = vor.u32 %v1451, %v1452
        %v1454 = vshll.u32 2102212464, %v1442
        %v1455 = vshrl.u32 920167782, %v1443
        %v1456 = vor.u32 %v1454, %v1455
        %v1457 = vshll.u32 920167782, %v1442
        %v1458 = vshrl.u32 1326507024, %v1443
        %v1459 = vor.u32 %v1457, %v1458
        %vm1460 = vcmp.lt.s32.totalorder %v1441, 1
        %vm1461 = vcmp.lt.s32.totalorder %v1441, 2
        %vm1462 = vcmp.lt.s32.totalorder %v1441, 3
        %vm1463 = vcmp.lt.s32.totalorder %v1441, 4
        %v1464 = vsel %vm1460, %v1444, %v1447
        %v1465 = vsel %vm1463, %v1453, 2102212464
        %v1466 = vsel %vm1462, %v1450, %v1465
        %v1467 = vsel %vm1461, %v1464, %v1466
        %v1468 = vsel %vm1460, %v1447, %v1450
        %v1469 = vsel %vm1463, %v1456, 920167782
        %v1470 = vsel %vm1462, %v1453, %v1469
        %v1471 = vsel %vm1461, %v1468, %v1470
        %v1472 = vsel %vm1460, %v1450, %v1453
        %v1473 = vsel %vm1463, %v1459, 1326507024
        %v1474 = vsel %vm1462, %v1456, %v1473
        %v1475 = vsel %vm1461, %v1472, %v1474
        %v1476 = vshll.u32 %v1436, 8
        %v1477 = vmul.u32.u64.compose %v1476, %v1475
        %v1478 = vextract.low.u32 %v1477
        %v1479 = vextract.high.u32 %v1477
        %v1480 = vmul.u32.u64.compose %v1476, %v1471
        %v1481 = vextract.low.u32 %v1480
        %v1482 = vextract.high.u32 %v1480
        %v1483 = vmul.u32 %v1476, %v1467
        %v1484 = vadd.s32 %v1479, %v1481
        %vm1485 = vc.u32 %v1479, %v1481
        %v1486 = vadd.s32 %v1482, 1
        %v1487 = vsel %vm1485, %v1486, %v1482
        %v1488 = vadd.s32 %v1483, %v1487
        %v1489 = vadd.s32 %v1488, 536870912
        %v1490 = vshrl.u32 %v1489, 30
        %v1491 = vshll.u32 %v1490, 30
        %v1492 = vsub.s32 %v1488, %v1491
        %vm1493 = vcmp.lt.s32.totalorder %v1492, 0
        %v1494 = vsub.s32 0, %v1492
        %v1495 = vsel %vm1493, %v1494, %v1492
        %v1496 = vclz %v1495
        %v1497 = vsub.s32 %v1496, 2
        %vm1498 = vcmp.gt.s32.totalorder 0, %v1497
        %v1499 = vsel %vm1498, 0, %v1497
        %v1500 = vsub.s32 32, %v1499
        %v1501 = vshll.u32 %v1492, %v1499
        %v1502 = vshrl.u32 %v1484, %v1500
        %v1503 = vor.u32 %v1501, %v1502
        %v1504 = vsub.s32 4294967266, %v1499
        %v1505 = vadd.s32 %v1504, 127
        %v1506 = vshll.u32 %v1505, 23
        %v1507 = vor.u32 4788187, %v1506
        %v1508 = vand.u32 2147483647, %v1507
        %v1510 = vcvt.s32.f32 %v1503
        %v1511 = vmul.f32 %v1510, %v1508
        %v1512 = vxor.u32 %v1511, 2147483648
        %v1513 = vsel %vm1430, %v1512, %v1511
        %v1514 = vsub.s32 4, %v1490
        %v1515 = vsel %vm1430, %v1514, %v1490
        %v1516 = vsel %vm1429, %v1008, %v1513
        %v1517 = vsel %vm1429, 0, %v1515
        %v1518 = vcosq.f32.pop %v1516
        %v1519 = vsinq.f32.pop %v1516
        %vm1520 = vweird.f32 %v1008
        %v1521 = vand.u32 %v1517, 3
        %vm1522 = vcmp.lt.s32.totalorder %v1521, 2
        %vm1523 = vcmp.eq.s32.totalorder %v1521, 0
        %v1524 = vxor.u32 %v1519, 2147483648
        %v1525 = vsel %vm1523, %v1518, %v1524
        %vm1526 = vcmp.eq.s32.totalorder %v1521, 2
        %v1527 = vxor.u32 %v1518, 2147483648
        %v1528 = vsel %vm1526, %v1527, %v1519
        %v1529 = vsel %vm1522, %v1525, %v1528
        %v1530 = vsel %vm1520, nan, %v1529
        %v1531 = vand.u32 2147483647, %v1009
        %vm1532 = vcmp.le.f32.partialorder %v1531, 0.7853982
        %vm1533 = vcmp.lt.s32.totalorder %v1009, 0
        %v1534 = vand.u32 %v1009, 2139095040
        %v1535 = vshrl.u32 %v1534, 23
        %v1536 = vsub.s32 %v1535, 127
        %v1537 = vand.u32 2147483647, %v1009
        %v1538 = vand.u32 %v1537, 8388607
        %v1539 = vor.u32 %v1538, 8388608
        %v1540 = vsub.s32 0, %v1539
        %v1541 = vadd.s32 %v1536, 1
        %vm1542 = vcmp.gt.s32.totalorder %v1541, 0
        %v1543 = vsel %vm1542, %v1541, 0
        %v1544 = vshrl.u32 %v1543, 5
        %v1545 = vand.u32 %v1543, 31
        %v1546 = vsub.s32 32, %v1545
        %v1547 = vshrl.u32 683565275, %v1546
        %v1548 = vshll.u32 683565275, %v1545
        %v1549 = vshrl.u32 2475754826, %v1546
        %v1550 = vor.u32 %v1548, %v1549
        %v1551 = vshll.u32 2475754826, %v1545
        %v1552 = vshrl.u32 2131351028, %v1546
        %v1553 = vor.u32 %v1551, %v1552
        %v1554 = vshll.u32 2131351028, %v1545
        %v1555 = vshrl.u32 2102212464, %v1546
        %v1556 = vor.u32 %v1554, %v1555
        %v1557 = vshll.u32 2102212464, %v1545
        %v1558 = vshrl.u32 920167782, %v1546
        %v1559 = vor.u32 %v1557, %v1558
        %v1560 = vshll.u32 920167782, %v1545
        %v1561 = vshrl.u32 1326507024, %v1546
        %v1562 = vor.u32 %v1560, %v1561
        %vm1563 = vcmp.lt.s32.totalorder %v1544, 1
        %vm1564 = vcmp.lt.s32.totalorder %v1544, 2
        %vm1565 = vcmp.lt.s32.totalorder %v1544, 3
        %vm1566 = vcmp.lt.s32.totalorder %v1544, 4
        %v1567 = vsel %vm1563, %v1547, %v1550
        %v1568 = vsel %vm1566, %v1556, 2102212464
        %v1569 = vsel %vm1565, %v1553, %v1568
        %v1570 = vsel %vm1564, %v1567, %v1569
        %v1571 = vsel %vm1563, %v1550, %v1553
        %v1572 = vsel %vm1566, %v1559, 920167782
        %v1573 = vsel %vm1565, %v1556, %v1572
        %v1574 = vsel %vm1564, %v1571, %v1573
        %v1575 = vsel %vm1563, %v1553, %v1556
        %v1576 = vsel %vm1566, %v1562, 1326507024
        %v1577 = vsel %vm1565, %v1559, %v1576
        %v1578 = vsel %vm1564, %v1575, %v1577
        %v1579 = vshll.u32 %v1539, 8
        %v1580 = vmul.u32.u64.compose %v1579, %v1578
        %v1581 = vextract.low.u32 %v1580
        %v1582 = vextract.high.u32 %v1580
        %v1583 = vmul.u32.u64.compose %v1579, %v1574
        %v1584 = vextract.low.u32 %v1583
        %v1585 = vextract.high.u32 %v1583
        %v1586 = vmul.u32 %v1579, %v1570
        %v1587 = vadd.s32 %v1582, %v1584
        %vm1588 = vc.u32 %v1582, %v1584
        %v1589 = vadd.s32 %v1585, 1
        %v1590 = vsel %vm1588, %v1589, %v1585
        %v1591 = vadd.s32 %v1586, %v1590
        %v1592 = vadd.s32 %v1591, 536870912
        %v1593 = vshrl.u32 %v1592, 30
        %v1594 = vshll.u32 %v1593, 30
        %v1595 = vsub.s32 %v1591, %v1594
        %vm1596 = vcmp.lt.s32.totalorder %v1595, 0
        %v1597 = vsub.s32 0, %v1595
        %v1598 = vsel %vm1596, %v1597, %v1595
        %v1599 = vclz %v1598
        %v1600 = vsub.s32 %v1599, 2
        %vm1601 = vcmp.gt.s32.totalorder 0, %v1600
        %v1602 = vsel %vm1601, 0, %v1600
        %v1603 = vsub.s32 32, %v1602
        %v1604 = vshll.u32 %v1595, %v1602
        %v1605 = vshrl.u32 %v1587, %v1603
        %v1606 = vor.u32 %v1604, %v1605
        %v1607 = vsub.s32 4294967266, %v1602
        %v1608 = vadd.s32 %v1607, 127
        %v1609 = vshll.u32 %v1608, 23
        %v1610 = vor.u32 4788187, %v1609
        %v1611 = vand.u32 2147483647, %v1610
        %v1613 = vcvt.s32.f32 %v1606
        %v1614 = vmul.f32 %v1613, %v1611
        %v1615 = vxor.u32 %v1614, 2147483648
        %v1616 = vsel %vm1533, %v1615, %v1614
        %v1617 = vsub.s32 4, %v1593
        %v1618 = vsel %vm1533, %v1617, %v1593
        %v1619 = vsel %vm1532, %v1009, %v1616
        %v1620 = vsel %vm1532, 0, %v1618
        %v1621 = vcosq.f32.pop %v1619
        %v1622 = vsinq.f32.pop %v1619
        %vm1623 = vweird.f32 %v1009
        %v1624 = vand.u32 %v1620, 3
        %vm1625 = vcmp.lt.s32.totalorder %v1624, 2
        %vm1626 = vcmp.eq.s32.totalorder %v1624, 0
        %v1627 = vxor.u32 %v1622, 2147483648
        %v1628 = vsel %vm1626, %v1621, %v1627
        %vm1629 = vcmp.eq.s32.totalorder %v1624, 2
        %v1630 = vxor.u32 %v1621, 2147483648
        %v1631 = vsel %vm1629, %v1630, %v1622
        %v1632 = vsel %vm1625, %v1628, %v1631
        %v1633 = vsel %vm1623, nan, %v1632
        %v1634 = vand.u32 2147483647, %v1010
        %vm1635 = vcmp.le.f32.partialorder %v1634, 0.7853982
        %vm1636 = vcmp.lt.s32.totalorder %v1010, 0
        %v1637 = vand.u32 %v1010, 2139095040
        %v1638 = vshrl.u32 %v1637, 23
        %v1639 = vsub.s32 %v1638, 127
        %v1640 = vand.u32 2147483647, %v1010
        %v1641 = vand.u32 %v1640, 8388607
        %v1642 = vor.u32 %v1641, 8388608
        %v1643 = vsub.s32 0, %v1642
        %v1644 = vadd.s32 %v1639, 1
        %vm1645 = vcmp.gt.s32.totalorder %v1644, 0
        %v1646 = vsel %vm1645, %v1644, 0
        %v1647 = vshrl.u32 %v1646, 5
        %v1648 = vand.u32 %v1646, 31
        %v1649 = vsub.s32 32, %v1648
        %v1650 = vshrl.u32 683565275, %v1649
        %v1651 = vshll.u32 683565275, %v1648
        %v1652 = vshrl.u32 2475754826, %v1649
        %v1653 = vor.u32 %v1651, %v1652
        %v1654 = vshll.u32 2475754826, %v1648
        %v1655 = vshrl.u32 2131351028, %v1649
        %v1656 = vor.u32 %v1654, %v1655
        %v1657 = vshll.u32 2131351028, %v1648
        %v1658 = vshrl.u32 2102212464, %v1649
        %v1659 = vor.u32 %v1657, %v1658
        %v1660 = vshll.u32 2102212464, %v1648
        %v1661 = vshrl.u32 920167782, %v1649
        %v1662 = vor.u32 %v1660, %v1661
        %v1663 = vshll.u32 920167782, %v1648
        %v1664 = vshrl.u32 1326507024, %v1649
        %v1665 = vor.u32 %v1663, %v1664
        %vm1666 = vcmp.lt.s32.totalorder %v1647, 1
        %vm1667 = vcmp.lt.s32.totalorder %v1647, 2
        %vm1668 = vcmp.lt.s32.totalorder %v1647, 3
        %vm1669 = vcmp.lt.s32.totalorder %v1647, 4
        %v1670 = vsel %vm1666, %v1650, %v1653
        %v1671 = vsel %vm1669, %v1659, 2102212464
        %v1672 = vsel %vm1668, %v1656, %v1671
        %v1673 = vsel %vm1667, %v1670, %v1672
        %v1674 = vsel %vm1666, %v1653, %v1656
        %v1675 = vsel %vm1669, %v1662, 920167782
        %v1676 = vsel %vm1668, %v1659, %v1675
        %v1677 = vsel %vm1667, %v1674, %v1676
        %v1678 = vsel %vm1666, %v1656, %v1659
        %v1679 = vsel %vm1669, %v1665, 1326507024
        %v1680 = vsel %vm1668, %v1662, %v1679
        %v1681 = vsel %vm1667, %v1678, %v1680
        %v1682 = vshll.u32 %v1642, 8
        %v1683 = vmul.u32.u64.compose %v1682, %v1681
        %v1684 = vextract.low.u32 %v1683
        %v1685 = vextract.high.u32 %v1683
        %v1686 = vmul.u32.u64.compose %v1682, %v1677
        %v1687 = vextract.low.u32 %v1686
        %v1688 = vextract.high.u32 %v1686
        %v1689 = vmul.u32 %v1682, %v1673
        %v1690 = vadd.s32 %v1685, %v1687
        %vm1691 = vc.u32 %v1685, %v1687
        %v1692 = vadd.s32 %v1688, 1
        %v1693 = vsel %vm1691, %v1692, %v1688
        %v1694 = vadd.s32 %v1689, %v1693
        %v1695 = vadd.s32 %v1694, 536870912
        %v1696 = vshrl.u32 %v1695, 30
        %v1697 = vshll.u32 %v1696, 30
        %v1698 = vsub.s32 %v1694, %v1697
        %vm1699 = vcmp.lt.s32.totalorder %v1698, 0
        %v1700 = vsub.s32 0, %v1698
        %v1701 = vsel %vm1699, %v1700, %v1698
        %v1702 = vclz %v1701
        %v1703 = vsub.s32 %v1702, 2
        %vm1704 = vcmp.gt.s32.totalorder 0, %v1703
        %v1705 = vsel %vm1704, 0, %v1703
        %v1706 = vsub.s32 32, %v1705
        %v1707 = vshll.u32 %v1698, %v1705
        %v1708 = vshrl.u32 %v1690, %v1706
        %v1709 = vor.u32 %v1707, %v1708
        %v1710 = vsub.s32 4294967266, %v1705
        %v1711 = vadd.s32 %v1710, 127
        %v1712 = vshll.u32 %v1711, 23
        %v1713 = vor.u32 4788187, %v1712
        %v1714 = vand.u32 2147483647, %v1713
        %v1716 = vcvt.s32.f32 %v1709
        %v1717 = vmul.f32 %v1716, %v1714
        %v1718 = vxor.u32 %v1717, 2147483648
        %v1719 = vsel %vm1636, %v1718, %v1717
        %v1720 = vsub.s32 4, %v1696
        %v1721 = vsel %vm1636, %v1720, %v1696
        %v1722 = vsel %vm1635, %v1010, %v1719
        %v1723 = vsel %vm1635, 0, %v1721
        %v1724 = vcosq.f32.pop %v1722
        %v1725 = vsinq.f32.pop %v1722
        %vm1726 = vweird.f32 %v1010
        %v1727 = vand.u32 %v1723, 3
        %vm1728 = vcmp.lt.s32.totalorder %v1727, 2
        %vm1729 = vcmp.eq.s32.totalorder %v1727, 0
        %v1730 = vxor.u32 %v1725, 2147483648
        %v1731 = vsel %vm1729, %v1724, %v1730
        %vm1732 = vcmp.eq.s32.totalorder %v1727, 2
        %v1733 = vxor.u32 %v1724, 2147483648
        %v1734 = vsel %vm1732, %v1733, %v1725
        %v1735 = vsel %vm1728, %v1731, %v1734
        %v1736 = vsel %vm1726, nan, %v1735
        %v1737 = vand.u32 2147483647, %v1011
        %vm1738 = vcmp.le.f32.partialorder %v1737, 0.7853982
        %vm1739 = vcmp.lt.s32.totalorder %v1011, 0
        %v1740 = vand.u32 %v1011, 2139095040
        %v1741 = vshrl.u32 %v1740, 23
        %v1742 = vsub.s32 %v1741, 127
        %v1743 = vand.u32 2147483647, %v1011
        %v1744 = vand.u32 %v1743, 8388607
        %v1745 = vor.u32 %v1744, 8388608
        %v1746 = vsub.s32 0, %v1745
        %v1747 = vadd.s32 %v1742, 1
        %vm1748 = vcmp.gt.s32.totalorder %v1747, 0
        %v1749 = vsel %vm1748, %v1747, 0
        %v1750 = vshrl.u32 %v1749, 5
        %v1751 = vand.u32 %v1749, 31
        %v1752 = vsub.s32 32, %v1751
        %v1753 = vshrl.u32 683565275, %v1752
        %v1754 = vshll.u32 683565275, %v1751
        %v1755 = vshrl.u32 2475754826, %v1752
        %v1756 = vor.u32 %v1754, %v1755
        %v1757 = vshll.u32 2475754826, %v1751
        %v1758 = vshrl.u32 2131351028, %v1752
        %v1759 = vor.u32 %v1757, %v1758
        %v1760 = vshll.u32 2131351028, %v1751
        %v1761 = vshrl.u32 2102212464, %v1752
        %v1762 = vor.u32 %v1760, %v1761
        %v1763 = vshll.u32 2102212464, %v1751
        %v1764 = vshrl.u32 920167782, %v1752
        %v1765 = vor.u32 %v1763, %v1764
        %v1766 = vshll.u32 920167782, %v1751
        %v1767 = vshrl.u32 1326507024, %v1752
        %v1768 = vor.u32 %v1766, %v1767
        %vm1769 = vcmp.lt.s32.totalorder %v1750, 1
        %vm1770 = vcmp.lt.s32.totalorder %v1750, 2
        %vm1771 = vcmp.lt.s32.totalorder %v1750, 3
        %vm1772 = vcmp.lt.s32.totalorder %v1750, 4
        %v1773 = vsel %vm1769, %v1753, %v1756
        %v1774 = vsel %vm1772, %v1762, 2102212464
        %v1775 = vsel %vm1771, %v1759, %v1774
        %v1776 = vsel %vm1770, %v1773, %v1775
        %v1777 = vsel %vm1769, %v1756, %v1759
        %v1778 = vsel %vm1772, %v1765, 920167782
        %v1779 = vsel %vm1771, %v1762, %v1778
        %v1780 = vsel %vm1770, %v1777, %v1779
        %v1781 = vsel %vm1769, %v1759, %v1762
        %v1782 = vsel %vm1772, %v1768, 1326507024
        %v1783 = vsel %vm1771, %v1765, %v1782
        %v1784 = vsel %vm1770, %v1781, %v1783
        %v1785 = vshll.u32 %v1745, 8
        %v1786 = vmul.u32.u64.compose %v1785, %v1784
        %v1787 = vextract.low.u32 %v1786
        %v1788 = vextract.high.u32 %v1786
        %v1789 = vmul.u32.u64.compose %v1785, %v1780
        %v1790 = vextract.low.u32 %v1789
        %v1791 = vextract.high.u32 %v1789
        %v1792 = vmul.u32 %v1785, %v1776
        %v1793 = vadd.s32 %v1788, %v1790
        %vm1794 = vc.u32 %v1788, %v1790
        %v1795 = vadd.s32 %v1791, 1
        %v1796 = vsel %vm1794, %v1795, %v1791
        %v1797 = vadd.s32 %v1792, %v1796
        %v1798 = vadd.s32 %v1797, 536870912
        %v1799 = vshrl.u32 %v1798, 30
        %v1800 = vshll.u32 %v1799, 30
        %v1801 = vsub.s32 %v1797, %v1800
        %vm1802 = vcmp.lt.s32.totalorder %v1801, 0
        %v1803 = vsub.s32 0, %v1801
        %v1804 = vsel %vm1802, %v1803, %v1801
        %v1805 = vclz %v1804
        %v1806 = vsub.s32 %v1805, 2
        %vm1807 = vcmp.gt.s32.totalorder 0, %v1806
        %v1808 = vsel %vm1807, 0, %v1806
        %v1809 = vsub.s32 32, %v1808
        %v1810 = vshll.u32 %v1801, %v1808
        %v1811 = vshrl.u32 %v1793, %v1809
        %v1812 = vor.u32 %v1810, %v1811
        %v1813 = vsub.s32 4294967266, %v1808
        %v1814 = vadd.s32 %v1813, 127
        %v1815 = vshll.u32 %v1814, 23
        %v1816 = vor.u32 4788187, %v1815
        %v1817 = vand.u32 2147483647, %v1816
        %v1819 = vcvt.s32.f32 %v1812
        %v1820 = vmul.f32 %v1819, %v1817
        %v1821 = vxor.u32 %v1820, 2147483648
        %v1822 = vsel %vm1739, %v1821, %v1820
        %v1823 = vsub.s32 4, %v1799
        %v1824 = vsel %vm1739, %v1823, %v1799
        %v1825 = vsel %vm1738, %v1011, %v1822
        %v1826 = vsel %vm1738, 0, %v1824
        %v1827 = vcosq.f32.pop %v1825
        %v1828 = vsinq.f32.pop %v1825
        %vm1829 = vweird.f32 %v1011
        %v1830 = vand.u32 %v1826, 3
        %vm1831 = vcmp.lt.s32.totalorder %v1830, 2
        %vm1832 = vcmp.eq.s32.totalorder %v1830, 0
        %v1833 = vxor.u32 %v1828, 2147483648
        %v1834 = vsel %vm1832, %v1827, %v1833
        %vm1835 = vcmp.eq.s32.totalorder %v1830, 2
        %v1836 = vxor.u32 %v1827, 2147483648
        %v1837 = vsel %vm1835, %v1836, %v1828
        %v1838 = vsel %vm1831, %v1834, %v1837
        %v1839 = vsel %vm1829, nan, %v1838
        %s1840 = scalar_lea.vmem %s151, 10 [#allocation5]
        %1841 = vst [vmem:[%s1840] sm:$0x3] %v1115
        %s1842 = scalar_lea.vmem %s151, 26 [#allocation5]
        %1843 = vst [vmem:[%s1842] sm:$0x3] %v1530
        %s1844 = scalar_lea.vmem %s151, 14 [#allocation5]
        %1845 = vst [vmem:[%s1844] sm:$0x3] %v1219
        %s1846 = scalar_lea.vmem %s151, 30 [#allocation5]
        %1847 = vst [vmem:[%s1846] sm:$0x3] %v1633
        %s1848 = scalar_lea.vmem %s151, 18 [#allocation5]
        %1849 = vst [vmem:[%s1848] sm:$0x3] %v1323
        %s1850 = scalar_lea.vmem %s151, 34 [#allocation5]
        %1851 = vst [vmem:[%s1850] sm:$0x3] %v1736
        %s1852 = scalar_lea.vmem %s151, 22 [#allocation5]
        %1853 = vst [vmem:[%s1852] sm:$0x3] %v1427
        %s1854 = scalar_lea.vmem %s151, 38 [#allocation5]
        %1855 = vst [vmem:[%s1854] sm:$0x3] %v1839
        %s1856 = sand.u32 %s68, 1
        %s1857 = scalar_lea.sflag [#allocation4], %s1856
        %s1858 = sand.u32 %s68, 1
        %s1859 = smul.addr %s1858, 40
        %s1860 = scalar_lea.vmem [#allocation5], %s1859
        // Predicated region
        $region29: #{tpu_custom_call.1} parent=23 // pred_check
          %p1861 = pneg %p78
        $region30: #{tpu_custom_call.1} parent=23 // pred_check_branch
          %1863 = sbr.rel (%p1861) target = $region32
        $region31: #{tpu_custom_call.1} parent=23 // pred_region
          %s1865 = ssub.s32 640, 640
          %1866 = vsyncadd %s1857, %s1865
          %s1867 = smul.addr %s22, 20
          %s1868 = sadd.s32 %s23, %s1867
          %s1869 = smul.addr %s1868, 32
          %s1870 = scalar_lea.hbm %s1, %s1869
          %s1871 = sshll.u32 %s1860, 4
          %s1872 = int_to_ptr.vmem [resolvable:$true] %s1871
          %1877 = dma.vmem_to_hbm [thread:$0]  %s1872, 640, %s1870, %s1857, 32, 32, 2
        $region32: #{tpu_custom_call.1} parent=23 // pred_fallthru
          _
      $region24: #{tpu_custom_call.1} parent=5 // pred_fallthru
        _
      %p1878 = scmp.le.s32.totalorder 2, %s13
      // Predicated region
      $region33: #{tpu_custom_call.1} parent=5 // pred_check
        %p1879 = pneg %p1878
      $region34: #{tpu_custom_call.1} parent=5 // pred_check_branch
        %1881 = sbr.rel (%p1879) target = $region36
      $region35: #{tpu_custom_call.1} parent=5 // pred_region
        %s1882 = ssub.s32 %s13, 2
        // Predicated region
        $region37: #{tpu_custom_call.1} parent=35 // pred_check
          %p1883 = pneg %p84
        $region38: #{tpu_custom_call.1} parent=35 // pred_check_branch
          %1885 = sbr.rel (%p1883) target = $region40
        $region39: #{tpu_custom_call.1} parent=35 // pred_region
          %s1886 = sand.u32 %s69, 1
          %s1887 = scalar_lea.sflag [#allocation4], %s1886
          %s1888 = sand.u32 %s69, 1
          %s1889 = smul.addr %s1888, 40
          %s1890 = scalar_lea.vmem [#allocation5], %s1889
          %1891 = dma.done %s1887, 640
        $region40: #{tpu_custom_call.1} parent=35 // pred_fallthru
          _
      $region36: #{tpu_custom_call.1} parent=5 // pred_fallthru
        _
    $region6: #{tpu_custom_call.1} parent=1 // loop_footer
      %s17 = sadd.s32 1, %s13
    $region7: #{tpu_custom_call.1} parent=1 // loop_footer_branch
      %12 = sbr.rel target = $region3
    $region8: #{tpu_custom_call.1} parent=1 // loop_exit
      _
    %1892 = vsyncpa [#allocation3], 1
    %s1893 = scalar_lea.sflag [#allocation3], 1
    %1894 = vsyncpa %s1893, 1
    %1895 = vsyncpa [#allocation4], 1
    %s1896 = scalar_lea.sflag [#allocation4], 1
    %1897 = vsyncpa %s1896, 1

</llo_original>
